<compile_context>
chip_gen: v7x
topology: tpu7x:2x2x1
jax: 0.10.0
libtpu: 0.0.40
codegen_flags: <defaults>
</compile_context>

<pallas_src>
import functools

import jax
import jax.numpy as jnp
from jax import lax
from jax.experimental import pallas as pl
from jax.experimental.pallas import tpu as pltpu


def _round_up(x, m):
    return (x + m - 1) // m * m


# ----------------------------------------------------------------------------
# Fused Pallas kernel (B_TILE batch samples per grid step)
# ----------------------------------------------------------------------------
def _make_fused_cnn_kernel(W1, H2, W2, Pplane, X1ROWS, R1out,
                           C1PAD, C2PAD, F1PAD):
    S2 = H2 * W2
    # m2[r] = max over the 2x2 pool window whose top-left conv2-output row is r.
    L = 2 * (H2 - 1) * W1 + 2 * (W2 - 1) + 1

    def kernel(x_ref, w1_ref, b1_ref, w2_ref, b2_ref,
               wf1_ref, bf1_ref, wf2_ref, bf2_ref,
               out_ref, x1_s, a2_s):
        B, R0c, K1PAD = x_ref.shape

        # ---- conv1: single im2col matmul (+bias, +ReLU), M = B*R0c ----------
        x0 = x_ref[...].reshape(B * R0c, K1PAD)
        a1 = jnp.dot(x0, w1_ref[...], preferred_element_type=jnp.float32)
        a1 = jnp.maximum(a1 + b1_ref[...], 0.0)

        # ---- maxpool1: elementwise max of the 4 corner planes (no loop) -----
        # Rows were laid out in the wrapper as 4 contiguous planes of Pplane
        # rows each (one per 2x2 corner), so the pool is 3 vector maxes.
        a1r = a1.reshape(B, 4, Pplane, C1PAD)
        x1 = jnp.maximum(jnp.maximum(a1r[:, 0], a1r[:, 1]),
                         jnp.maximum(a1r[:, 2], a1r[:, 3]))     # (B,Pplane,C1PAD)
        x1_s[:, pl.ds(0, Pplane), :] = x1
        if X1ROWS > Pplane:
            # Only the never-pooled tail rows (read by conv2 only for outputs
            # that pool2 never consumes); keep them finite.
            x1_s[:, pl.ds(Pplane, X1ROWS - Pplane), :] = jnp.zeros(
                (B, X1ROWS - Pplane, C1PAD), jnp.float32)

        # ---- conv2: 9 shifted-row taps, M = B*R1out per dot (+bias, +ReLU) --
        # TODO(synk): optional K-packing of conv2 (only 16 of 128 K lanes are
        # real) skipped; it needs lane-offset stores and was flagged low priority.
        acc2 = jnp.zeros((B * R1out, C2PAD), jnp.float32)
        for kh in range(3):
            for kw in range(3):
                off = kh * W1 + kw
                lhs = x1_s[:, pl.ds(off, R1out), :].reshape(B * R1out, C1PAD)
                acc2 = acc2 + jnp.dot(lhs, w2_ref[kh * 3 + kw],
                                      preferred_element_type=jnp.float32)
        a2_s[...] = jnp.maximum(acc2 + b2_ref[...], 0.0).reshape(B, R1out, C2PAD)

        # ---- maxpool2 (4-slab max) + flatten + FC1 (+bias, +ReLU) -----------
        m2 = jnp.maximum(
            jnp.maximum(a2_s[:, pl.ds(0, L), :], a2_s[:, pl.ds(1, L), :]),
            jnp.maximum(a2_s[:, pl.ds(W1, L), :], a2_s[:, pl.ds(W1 + 1, L), :]))
        h1 = jnp.zeros((B, F1PAD), jnp.float32)
        for ph in range(H2):
            for pw in range(W2):
                s = ph * W2 + pw
                r = 2 * ph * W1 + 2 * pw
                # Torch's channel-major flatten order is absorbed into wf1_ref[s].
                h1 = h1 + jnp.dot(m2[:, r, :], wf1_ref[s],
                                  preferred_element_type=jnp.float32)
        h1 = jnp.maximum(h1 + bf1_ref[...], 0.0)

        # ---- FC2 -------------------------------------------------------------
        out = jnp.dot(h1, wf2_ref[...], preferred_element_type=jnp.float32)
        out_ref[0] = (out + bf2_ref[...]).astype(out_ref.dtype)

    return kernel


# ----------------------------------------------------------------------------
# Wrapper: one-time layout/padding prep + single fused pallas_call
# ----------------------------------------------------------------------------
@functools.partial(jax.jit, static_argnames=("n_classes",))
def cnn_forward(x, params, *, n_classes):
    (w1, b1), (w2, b2), (wf1, bf1), (wf2, bf2) = params
    N, Cin, H, W = x.shape
    C1, C2, F1 = w1.shape[0], w2.shape[0], wf1.shape[1]

    Ho1, Wo1 = H - 2, W - 2
    H1, W1 = Ho1 // 2, Wo1 // 2          # pool1 output spatial
    Ho2, Wo2 = H1 - 2, W1 - 2
    H2, W2 = Ho2 // 2, Wo2 // 2          # pool2 output spatial
    S2 = H2 * W2
    assert H1 >= 3 and W1 >= 3 and H2 >= 1 and W2 >= 1
    assert wf1.shape[0] == C2 * S2
    # Safety tie between the shifted-row conv2 and pool2 index ranges: pool2 only
    # consumes conv2 outputs with row/col coordinate <= 2*H2-1 / 2*W2-1, which are
    # >= 3 away from the pooled-map edge, so the "wrapped" pseudo-rows produced by
    # the shifted-slice conv2 (w > W1-3) are never read as valid data.
    assert 2 * H2 + 2 <= H1 and 2 * W2 + 2 <= W1

    # Channel / lane paddings (lane-dense, 128-multiples).
    C1PAD = _round_up(C1, 128)
    C2PAD = _round_up(C2, 128)
    F1PAD = _round_up(F1, 128)
    NCP = _round_up(n_classes, 128)
    K1 = 9 * Cin
    K1PAD = _round_up(K1, 128)

    # Row extents.
    P1 = H1 * W1                                  # valid pool1 rows per sample
    Pplane = _round_up(P1, 8)                     # per-corner-plane rows
    R0c = 4 * Pplane                              # conv1 im2col rows per sample
    L = 2 * (H2 - 1) * W1 + 2 * (W2 - 1) + 1      # pool2 slab length
    R1out = _round_up(W1 + L + 1, 8)              # conv2 output rows needed
    X1ROWS = _round_up(max(Pplane, R1out + 2 * W1 + 2), 8)

    # Batch tiling: B_TILE samples per grid step.  Cap at 8 so the per-step
    # footprint (double-buffered input block + scratches + weights ~ 4 MiB at
    # B_TILE=8 for 16x16 images) stays far below even v7x's 64 MiB VMEM; the
    # grid keeps >= 2 steps for N >= 2 so both v7x TensorCores get work.
    # On v5e/v6e (128 MiB VMEM) this cap could be raised.
    B_TILE = max(1, min(8, N // 2))
    num_blocks = -(-N // B_TILE)
    Npad = num_blocks * B_TILE

    f32 = jnp.float32

    # ---- conv1 im2col with corner-plane row ordering -------------------------
    # Plane k=(dh,dw): row p = ph*W1+pw holds the 3x3xCin patch of the conv1
    # output position (2*ph+dh, 2*pw+dw); pool1 in-kernel is then the max of the
    # 4 planes.  Patch flatten order is (kh,kw,ci) to match w1's row order.
    xt = jnp.transpose(x, (0, 2, 3, 1)).astype(f32)           # (N, H, W, Cin)
    ph_i = 2 * jnp.arange(H1)
    pw_j = 2 * jnp.arange(W1)
    planes = []
    for dh in range(2):
        for dw in range(2):
            taps = []
            for kh in range(3):
                for kw in range(3):
                    ii = (ph_i + dh + kh)[:, None]            # (H1, 1)
                    jj = (pw_j + dw + kw)[None, :]            # (1, W1)
                    taps.append(xt[:, ii, jj, :])             # (N, H1, W1, Cin)
            plane = jnp.stack(taps, axis=3).reshape(N, P1, K1)
            plane = jnp.pad(plane, ((0, 0), (0, Pplane - P1), (0, 0)))
            planes.append(plane)
    x0 = jnp.concatenate(planes, axis=1)                      # (N, R0c, K1)
    x0 = jnp.pad(x0, ((0, Npad - N), (0, 0), (0, K1PAD - K1)))

    # ---- weights / biases (zero-padded, lane-dense) ---------------------------
    w1m = jnp.transpose(w1, (2, 3, 1, 0)).reshape(K1, C1).astype(f32)
    w1p = jnp.zeros((K1PAD, C1PAD), f32).at[:K1, :C1].set(w1m)
    b1p = jnp.zeros((1, C1PAD), f32).at[0, :C1].set(b1.astype(f32))
    w2t = jnp.transpose(w2, (2, 3, 1, 0)).reshape(9, C1, C2).astype(f32)
    w2p = jnp.zeros((9, C1PAD, C2PAD), f32).at[:, :C1, :C2].set(w2t)
    b2p = jnp.zeros((1, C2PAD), f32).at[0, :C2].set(b2.astype(f32))
    # FC1: absorb torch flatten order (c*S2 + s) -> per-pooled-position weights.
    wf1r = wf1.reshape(C2, S2, F1).transpose(1, 0, 2).astype(f32)   # (s, c, f)
    wf1p = jnp.zeros((S2, C2PAD, F1PAD), f32).at[:, :C2, :F1].set(wf1r)
    bf1p = jnp.zeros((1, F1PAD), f32).at[0, :F1].set(bf1.astype(f32))
    wf2p = jnp.zeros((F1PAD, NCP), f32).at[:F1, :n_classes].set(wf2.astype(f32))
    bf2p = jnp.zeros((1, NCP), f32).at[0, :n_classes].set(bf2.astype(f32))

    kernel = _make_fused_cnn_kernel(W1, H2, W2, Pplane, X1ROWS, R1out,
                                    C1PAD, C2PAD, F1PAD)

    grid_spec = pltpu.PrefetchScalarGridSpec(
        num_scalar_prefetch=0,
        grid=(num_blocks,),
        in_specs=[
            pl.BlockSpec((B_TILE, R0c, K1PAD), lambda i: (i, 0, 0)),   # im2col input
            pl.BlockSpec((K1PAD, C1PAD), lambda i: (0, 0)),            # conv1 W
            pl.BlockSpec((1, C1PAD), lambda i: (0, 0)),                # conv1 b
            pl.BlockSpec((9, C1PAD, C2PAD), lambda i: (0, 0, 0)),      # conv2 W
            pl.BlockSpec((1, C2PAD), lambda i: (0, 0)),                # conv2 b
            pl.BlockSpec((S2, C2PAD, F1PAD), lambda i: (0, 0, 0)),     # fc1 W per pos
            pl.BlockSpec((1, F1PAD), lambda i: (0, 0)),                # fc1 b
            pl.BlockSpec((F1PAD, NCP), lambda i: (0, 0)),              # fc2 W
            pl.BlockSpec((1, NCP), lambda i: (0, 0)),                  # fc2 b
        ],
        out_specs=pl.BlockSpec((1, B_TILE, NCP), lambda i: (i, 0, 0)),
        scratch_shapes=[
            pltpu.VMEM((B_TILE, X1ROWS, C1PAD), f32),   # pool1 out / conv2 in
            pltpu.VMEM((B_TILE, R1out, C2PAD), f32),    # conv2 out (post-ReLU)
        ],
    )

    out_p = pl.pallas_call(
        kernel,
        out_shape=jax.ShapeDtypeStruct((num_blocks, B_TILE, NCP), f32),
        grid_spec=grid_spec,
        compiler_params=pltpu.CompilerParams(
            dimension_semantics=("parallel",),
            vmem_limit_bytes=32 * 1024 * 1024,
        ),
    )(x0, w1p, b1p, w2p, b2p, wf1p, bf1p, wf2p, bf2p)

    return out_p.reshape(Npad, NCP)[:N, :n_classes]


# ----------------------------------------------------------------------------
# Pure-JAX reference (correctness check)
# ----------------------------------------------------------------------------
def cnn_forward_ref(x, params):
    (w1, b1), (w2, b2), (wf1, bf1), (wf2, bf2) = params
    dn = ("NCHW", "OIHW", "NCHW")

    def conv_relu(z, w, b):
        z = lax.conv_general_dilated(z, w, (1, 1), "VALID", dimension_numbers=dn)
        return jnp.maximum(z + b[None, :, None, None], 0.0)

    def pool(z):
        return lax.reduce_window(z, -jnp.inf, lax.max, (1, 1, 2, 2), (1, 1, 2, 2), "VALID")

    y = pool(conv_relu(x, w1, b1))
    y = pool(conv_relu(y, w2, b2))
    flat = y.reshape(y.shape[0], -1)
    h = jnp.maximum(flat @ wf1 + bf1, 0.0)
    return h @ wf2 + bf2


# ----------------------------------------------------------------------------
# Parameter setup (deterministic, synthetic)
# ----------------------------------------------------------------------------
def init_params(key, in_channels, n_classes, img_size):
    s1 = (img_size - 2) // 2
    s2 = (s1 - 2) // 2
    out_size = 32 * s2 * s2

    ks = jax.random.split(key, 8)
    scale = 0.1
    w1 = scale * jax.random.normal(ks[0], (16, in_channels, 3, 3), jnp.float32)
    b1 = scale * jax.random.normal(ks[1], (16,), jnp.float32)
    w2 = scale * jax.random.normal(ks[2], (32, 16, 3, 3), jnp.float32)
    b2 = scale * jax.random.normal(ks[3], (32,), jnp.float32)
    wf1 = scale * jax.random.normal(ks[4], (out_size, 128), jnp.float32)
    bf1 = scale * jax.random.normal(ks[5], (128,), jnp.float32)
    wf2 = scale * jax.random.normal(ks[6], (128, n_classes), jnp.float32)
    bf2 = scale * jax.random.normal(ks[7], (n_classes,), jnp.float32)
    return ((w1, b1), (w2, b2), (wf1, bf1), (wf2, bf2))


if __name__ == "__main__":
    batch, in_channels, n_classes, img_size = 2, 4, 10, 16

    key = jax.random.PRNGKey(0)
    k_x, k_p = jax.random.split(key)
    x = jax.random.normal(k_x, (batch, in_channels, img_size, img_size), jnp.float32)
    params = init_params(k_p, in_channels, n_classes, img_size)

    out = jax.block_until_ready(cnn_forward(x, params, n_classes=n_classes))
    ref = jax.block_until_ready(cnn_forward_ref(x, params))

    assert out.shape == (batch, n_classes), out.shape
    assert jnp.allclose(out, ref, rtol=1e-4, atol=1e-4), (
        f"max abs err = {jnp.max(jnp.abs(out - ref))}"
    )

    print("KERNEL_OK")
</pallas_src>

<mosaic_0001>
module attributes {stable_mosaic.version = 11 : i64} {
  func.func @kernel(%arg0: i32, %arg1: memref<1x224x128xf32, #tpu.memory_space<vmem>>, %arg2: memref<128x128xf32, #tpu.memory_space<vmem>>, %arg3: memref<1x128xf32, #tpu.memory_space<vmem>>, %arg4: memref<9x128x128xf32, #tpu.memory_space<vmem>>, %arg5: memref<1x128xf32, #tpu.memory_space<vmem>>, %arg6: memref<4x128x128xf32, #tpu.memory_space<vmem>>, %arg7: memref<1x128xf32, #tpu.memory_space<vmem>>, %arg8: memref<128x128xf32, #tpu.memory_space<vmem>>, %arg9: memref<1x128xf32, #tpu.memory_space<vmem>>, %arg10: memref<1x1x128xf32, #tpu.memory_space<vmem>>, %arg11: memref<1x56x128xf32, #tpu.memory_space<vmem>>, %arg12: memref<1x32x128xf32, #tpu.memory_space<vmem>>) attributes {dimension_semantics = [#tpu.dimension_semantics<parallel>], iteration_bounds = array<i64: 2>, scalar_prefetch = 0 : i64, scratch_operands = 2 : i64, tpu.core_type = #tpu.core_type<tc>, window_params = [{transform_indices = @transform_0, window_bounds = array<i64: 1, 224, 128>}, {pipeline_mode = #tpu.pipeline_mode<synchronous>, transform_indices = @transform_1, window_bounds = array<i64: 128, 128>}, {pipeline_mode = #tpu.pipeline_mode<synchronous>, transform_indices = @transform_2, window_bounds = array<i64: 1, 128>}, {pipeline_mode = #tpu.pipeline_mode<synchronous>, transform_indices = @transform_3, window_bounds = array<i64: 9, 128, 128>}, {pipeline_mode = #tpu.pipeline_mode<synchronous>, transform_indices = @transform_4, window_bounds = array<i64: 1, 128>}, {pipeline_mode = #tpu.pipeline_mode<synchronous>, transform_indices = @transform_5, window_bounds = array<i64: 4, 128, 128>}, {pipeline_mode = #tpu.pipeline_mode<synchronous>, transform_indices = @transform_6, window_bounds = array<i64: 1, 128>}, {pipeline_mode = #tpu.pipeline_mode<synchronous>, transform_indices = @transform_7, window_bounds = array<i64: 128, 128>}, {pipeline_mode = #tpu.pipeline_mode<synchronous>, transform_indices = @transform_8, window_bounds = array<i64: 1, 128>}, {transform_indices = @transform_9, window_bounds = array<i64: 1, 1, 128>}]} {
    %c0 = arith.constant 0 : index
    %c0_0 = arith.constant 0 : index
    %c0_1 = arith.constant 0 : index
    %0 = vector.load %arg1[%c0, %c0_0, %c0_1] : memref<1x224x128xf32, #tpu.memory_space<vmem>>, vector<1x224x128xf32>
    %1 = vector.shape_cast %0 : vector<1x224x128xf32> to vector<224x128xf32>
    %c0_2 = arith.constant 0 : index
    %c0_3 = arith.constant 0 : index
    %2 = vector.load %arg2[%c0_2, %c0_3] : memref<128x128xf32, #tpu.memory_space<vmem>>, vector<128x128xf32>
    %cst = arith.constant dense<0.000000e+00> : vector<224x128xf32>
    %3 = tpu.matmul %1, %2, %cst {dimension_numbers = #tpu.dot_dimension_numbers<[1], [0], [0], [1], [0, 0, 1, 1], [], []>} : vector<224x128xf32>, vector<128x128xf32>, vector<224x128xf32> -> vector<224x128xf32>
    %c0_4 = arith.constant 0 : index
    %c0_5 = arith.constant 0 : index
    %4 = vector.load %arg3[%c0_4, %c0_5] : memref<1x128xf32, #tpu.memory_space<vmem>>, vector<1x128xf32>
    %5 = vector.broadcast %4 : vector<1x128xf32> to vector<224x128xf32>
    %6 = arith.addf %3, %5 : vector<224x128xf32>
    %cst_6 = arith.constant 0.000000e+00 : f32
    %7 = vector.broadcast %cst_6 : f32 to vector<224x128xf32>
    %8 = arith.maximumf %6, %7 : vector<224x128xf32>
    %9 = vector.shape_cast %8 : vector<224x128xf32> to vector<1x4x56x128xf32>
    %10 = vector.extract_strided_slice %9 {offsets = [0, 0, 0, 0], sizes = [1, 1, 56, 128], strides = [1, 1, 1, 1]} : vector<1x4x56x128xf32> to vector<1x1x56x128xf32>
    %11 = vector.shape_cast %10 : vector<1x1x56x128xf32> to vector<1x56x128xf32>
    %12 = vector.extract_strided_slice %9 {offsets = [0, 1, 0, 0], sizes = [1, 1, 56, 128], strides = [1, 1, 1, 1]} : vector<1x4x56x128xf32> to vector<1x1x56x128xf32>
    %13 = vector.shape_cast %12 : vector<1x1x56x128xf32> to vector<1x56x128xf32>
    %14 = arith.maximumf %11, %13 : vector<1x56x128xf32>
    %15 = vector.extract_strided_slice %9 {offsets = [0, 2, 0, 0], sizes = [1, 1, 56, 128], strides = [1, 1, 1, 1]} : vector<1x4x56x128xf32> to vector<1x1x56x128xf32>
    %16 = vector.shape_cast %15 : vector<1x1x56x128xf32> to vector<1x56x128xf32>
    %17 = vector.extract_strided_slice %9 {offsets = [0, 3, 0, 0], sizes = [1, 1, 56, 128], strides = [1, 1, 1, 1]} : vector<1x4x56x128xf32> to vector<1x1x56x128xf32>
    %18 = vector.shape_cast %17 : vector<1x1x56x128xf32> to vector<1x56x128xf32>
    %19 = arith.maximumf %16, %18 : vector<1x56x128xf32>
    %20 = arith.maximumf %14, %19 : vector<1x56x128xf32>
    %c0_7 = arith.constant 0 : index
    %c0_8 = arith.constant 0 : index
    %c0_9 = arith.constant 0 : index
    %21 = vector.load %arg11[%c0_7, %c0_8, %c0_9] : memref<1x56x128xf32, #tpu.memory_space<vmem>>, vector<1x56x128xf32>
    tpu.vector_store %arg11[%c0_7, %c0_8, %c0_9], %20 {strides = array<i32>} : memref<1x56x128xf32, #tpu.memory_space<vmem>>, vector<1x56x128xf32>,
    %cst_10 = arith.constant 0.000000e+00 : f32
    %22 = vector.broadcast %cst_10 : f32 to vector<32x128xf32>
    %c0_11 = arith.constant 0 : index
    %c0_12 = arith.constant 0 : index
    %c0_13 = arith.constant 0 : index
    %23 = vector.load %arg11[%c0_11, %c0_12, %c0_13] : memref<1x56x128xf32, #tpu.memory_space<vmem>>, vector<1x32x128xf32>
    %24 = vector.shape_cast %23 : vector<1x32x128xf32> to vector<32x128xf32>
    %c0_14 = arith.constant 0 : index
    %c0_15 = arith.constant 0 : index
    %c0_16 = arith.constant 0 : index
    %25 = vector.load %arg4[%c0_14, %c0_15, %c0_16] : memref<9x128x128xf32, #tpu.memory_space<vmem>>, vector<1x128x128xf32>
    %26 = vector.shape_cast %25 : vector<1x128x128xf32> to vector<128x128xf32>
    %cst_17 = arith.constant dense<0.000000e+00> : vector<32x128xf32>
    %27 = tpu.matmul %24, %26, %cst_17 {dimension_numbers = #tpu.dot_dimension_numbers<[1], [0], [0], [1], [0, 0, 1, 1], [], []>} : vector<32x128xf32>, vector<128x128xf32>, vector<32x128xf32> -> vector<32x128xf32>
    %28 = arith.addf %22, %27 : vector<32x128xf32>
    %c0_18 = arith.constant 0 : index
    %c1 = arith.constant 1 : index
    %c0_19 = arith.constant 0 : index
    %29 = vector.load %arg11[%c0_18, %c1, %c0_19] : memref<1x56x128xf32, #tpu.memory_space<vmem>>, vector<1x32x128xf32>
    %30 = vector.shape_cast %29 : vector<1x32x128xf32> to vector<32x128xf32>
    %c1_20 = arith.constant 1 : index
    %c0_21 = arith.constant 0 : index
    %c0_22 = arith.constant 0 : index
    %31 = vector.load %arg4[%c1_20, %c0_21, %c0_22] : memref<9x128x128xf32, #tpu.memory_space<vmem>>, vector<1x128x128xf32>
    %32 = vector.shape_cast %31 : vector<1x128x128xf32> to vector<128x128xf32>
    %cst_23 = arith.constant dense<0.000000e+00> : vector<32x128xf32>
    %33 = tpu.matmul %30, %32, %cst_23 {dimension_numbers = #tpu.dot_dimension_numbers<[1], [0], [0], [1], [0, 0, 1, 1], [], []>} : vector<32x128xf32>, vector<128x128xf32>, vector<32x128xf32> -> vector<32x128xf32>
    %34 = arith.addf %28, %33 : vector<32x128xf32>
    %c0_24 = arith.constant 0 : index
    %c2 = arith.constant 2 : index
    %c0_25 = arith.constant 0 : index
    %35 = vector.load %arg11[%c0_24, %c2, %c0_25] : memref<1x56x128xf32, #tpu.memory_space<vmem>>, vector<1x32x128xf32>
    %36 = vector.shape_cast %35 : vector<1x32x128xf32> to vector<32x128xf32>
    %c2_26 = arith.constant 2 : index
    %c0_27 = arith.constant 0 : index
    %c0_28 = arith.constant 0 : index
    %37 = vector.load %arg4[%c2_26, %c0_27, %c0_28] : memref<9x128x128xf32, #tpu.memory_space<vmem>>, vector<1x128x128xf32>
    %38 = vector.shape_cast %37 : vector<1x128x128xf32> to vector<128x128xf32>
    %cst_29 = arith.constant dense<0.000000e+00> : vector<32x128xf32>
    %39 = tpu.matmul %36, %38, %cst_29 {dimension_numbers = #tpu.dot_dimension_numbers<[1], [0], [0], [1], [0, 0, 1, 1], [], []>} : vector<32x128xf32>, vector<128x128xf32>, vector<32x128xf32> -> vector<32x128xf32>
    %40 = arith.addf %34, %39 : vector<32x128xf32>
    %c0_30 = arith.constant 0 : index
    %c7 = arith.constant 7 : index
    %c0_31 = arith.constant 0 : index
    %41 = vector.load %arg11[%c0_30, %c7, %c0_31] : memref<1x56x128xf32, #tpu.memory_space<vmem>>, vector<1x32x128xf32>
    %42 = vector.shape_cast %41 : vector<1x32x128xf32> to vector<32x128xf32>
    %c3 = arith.constant 3 : index
    %c0_32 = arith.constant 0 : index
    %c0_33 = arith.constant 0 : index
    %43 = vector.load %arg4[%c3, %c0_32, %c0_33] : memref<9x128x128xf32, #tpu.memory_space<vmem>>, vector<1x128x128xf32>
    %44 = vector.shape_cast %43 : vector<1x128x128xf32> to vector<128x128xf32>
    %cst_34 = arith.constant dense<0.000000e+00> : vector<32x128xf32>
    %45 = tpu.matmul %42, %44, %cst_34 {dimension_numbers = #tpu.dot_dimension_numbers<[1], [0], [0], [1], [0, 0, 1, 1], [], []>} : vector<32x128xf32>, vector<128x128xf32>, vector<32x128xf32> -> vector<32x128xf32>
    %46 = arith.addf %40, %45 : vector<32x128xf32>
    %c0_35 = arith.constant 0 : index
    %c8 = arith.constant 8 : index
    %c0_36 = arith.constant 0 : index
    %47 = vector.load %arg11[%c0_35, %c8, %c0_36] : memref<1x56x128xf32, #tpu.memory_space<vmem>>, vector<1x32x128xf32>
    %48 = vector.shape_cast %47 : vector<1x32x128xf32> to vector<32x128xf32>
    %c4 = arith.constant 4 : index
    %c0_37 = arith.constant 0 : index
    %c0_38 = arith.constant 0 : index
    %49 = vector.load %arg4[%c4, %c0_37, %c0_38] : memref<9x128x128xf32, #tpu.memory_space<vmem>>, vector<1x128x128xf32>
    %50 = vector.shape_cast %49 : vector<1x128x128xf32> to vector<128x128xf32>
    %cst_39 = arith.constant dense<0.000000e+00> : vector<32x128xf32>
    %51 = tpu.matmul %48, %50, %cst_39 {dimension_numbers = #tpu.dot_dimension_numbers<[1], [0], [0], [1], [0, 0, 1, 1], [], []>} : vector<32x128xf32>, vector<128x128xf32>, vector<32x128xf32> -> vector<32x128xf32>
    %52 = arith.addf %46, %51 : vector<32x128xf32>
    %c0_40 = arith.constant 0 : index
    %c9 = arith.constant 9 : index
    %c0_41 = arith.constant 0 : index
    %53 = vector.load %arg11[%c0_40, %c9, %c0_41] : memref<1x56x128xf32, #tpu.memory_space<vmem>>, vector<1x32x128xf32>
    %54 = vector.shape_cast %53 : vector<1x32x128xf32> to vector<32x128xf32>
    %c5 = arith.constant 5 : index
    %c0_42 = arith.constant 0 : index
    %c0_43 = arith.constant 0 : index
    %55 = vector.load %arg4[%c5, %c0_42, %c0_43] : memref<9x128x128xf32, #tpu.memory_space<vmem>>, vector<1x128x128xf32>
    %56 = vector.shape_cast %55 : vector<1x128x128xf32> to vector<128x128xf32>
    %cst_44 = arith.constant dense<0.000000e+00> : vector<32x128xf32>
    %57 = tpu.matmul %54, %56, %cst_44 {dimension_numbers = #tpu.dot_dimension_numbers<[1], [0], [0], [1], [0, 0, 1, 1], [], []>} : vector<32x128xf32>, vector<128x128xf32>, vector<32x128xf32> -> vector<32x128xf32>
    %58 = arith.addf %52, %57 : vector<32x128xf32>
    %c0_45 = arith.constant 0 : index
    %c14 = arith.constant 14 : index
    %c0_46 = arith.constant 0 : index
    %59 = vector.load %arg11[%c0_45, %c14, %c0_46] : memref<1x56x128xf32, #tpu.memory_space<vmem>>, vector<1x32x128xf32>
    %60 = vector.shape_cast %59 : vector<1x32x128xf32> to vector<32x128xf32>
    %c6 = arith.constant 6 : index
    %c0_47 = arith.constant 0 : index
    %c0_48 = arith.constant 0 : index
    %61 = vector.load %arg4[%c6, %c0_47, %c0_48] : memref<9x128x128xf32, #tpu.memory_space<vmem>>, vector<1x128x128xf32>
    %62 = vector.shape_cast %61 : vector<1x128x128xf32> to vector<128x128xf32>
    %cst_49 = arith.constant dense<0.000000e+00> : vector<32x128xf32>
    %63 = tpu.matmul %60, %62, %cst_49 {dimension_numbers = #tpu.dot_dimension_numbers<[1], [0], [0], [1], [0, 0, 1, 1], [], []>} : vector<32x128xf32>, vector<128x128xf32>, vector<32x128xf32> -> vector<32x128xf32>
    %64 = arith.addf %58, %63 : vector<32x128xf32>
    %c0_50 = arith.constant 0 : index
    %c15 = arith.constant 15 : index
    %c0_51 = arith.constant 0 : index
    %65 = vector.load %arg11[%c0_50, %c15, %c0_51] : memref<1x56x128xf32, #tpu.memory_space<vmem>>, vector<1x32x128xf32>
    %66 = vector.shape_cast %65 : vector<1x32x128xf32> to vector<32x128xf32>
    %c7_52 = arith.constant 7 : index
    %c0_53 = arith.constant 0 : index
    %c0_54 = arith.constant 0 : index
    %67 = vector.load %arg4[%c7_52, %c0_53, %c0_54] : memref<9x128x128xf32, #tpu.memory_space<vmem>>, vector<1x128x128xf32>
    %68 = vector.shape_cast %67 : vector<1x128x128xf32> to vector<128x128xf32>
    %cst_55 = arith.constant dense<0.000000e+00> : vector<32x128xf32>
    %69 = tpu.matmul %66, %68, %cst_55 {dimension_numbers = #tpu.dot_dimension_numbers<[1], [0], [0], [1], [0, 0, 1, 1], [], []>} : vector<32x128xf32>, vector<128x128xf32>, vector<32x128xf32> -> vector<32x128xf32>
    %70 = arith.addf %64, %69 : vector<32x128xf32>
    %c0_56 = arith.constant 0 : index
    %c16 = arith.constant 16 : index
    %c0_57 = arith.constant 0 : index
    %71 = vector.load %arg11[%c0_56, %c16, %c0_57] : memref<1x56x128xf32, #tpu.memory_space<vmem>>, vector<1x32x128xf32>
    %72 = vector.shape_cast %71 : vector<1x32x128xf32> to vector<32x128xf32>
    %c8_58 = arith.constant 8 : index
    %c0_59 = arith.constant 0 : index
    %c0_60 = arith.constant 0 : index
    %73 = vector.load %arg4[%c8_58, %c0_59, %c0_60] : memref<9x128x128xf32, #tpu.memory_space<vmem>>, vector<1x128x128xf32>
    %74 = vector.shape_cast %73 : vector<1x128x128xf32> to vector<128x128xf32>
    %cst_61 = arith.constant dense<0.000000e+00> : vector<32x128xf32>
    %75 = tpu.matmul %72, %74, %cst_61 {dimension_numbers = #tpu.dot_dimension_numbers<[1], [0], [0], [1], [0, 0, 1, 1], [], []>} : vector<32x128xf32>, vector<128x128xf32>, vector<32x128xf32> -> vector<32x128xf32>
    %76 = arith.addf %70, %75 : vector<32x128xf32>
    %c0_62 = arith.constant 0 : index
    %c0_63 = arith.constant 0 : index
    %77 = vector.load %arg5[%c0_62, %c0_63] : memref<1x128xf32, #tpu.memory_space<vmem>>, vector<1x128xf32>
    %78 = vector.broadcast %77 : vector<1x128xf32> to vector<32x128xf32>
    %79 = arith.addf %76, %78 : vector<32x128xf32>
    %cst_64 = arith.constant 0.000000e+00 : f32
    %80 = vector.broadcast %cst_64 : f32 to vector<32x128xf32>
    %81 = arith.maximumf %79, %80 : vector<32x128xf32>
    %82 = vector.shape_cast %81 : vector<32x128xf32> to vector<1x32x128xf32>
    %c0_65 = arith.constant 0 : index
    %c0_66 = arith.constant 0 : index
    %c0_67 = arith.constant 0 : index
    %83 = vector.load %arg12[%c0_65, %c0_66, %c0_67] : memref<1x32x128xf32, #tpu.memory_space<vmem>>, vector<1x32x128xf32>
    tpu.vector_store %arg12[%c0_65, %c0_66, %c0_67], %82 {strides = array<i32>} : memref<1x32x128xf32, #tpu.memory_space<vmem>>, vector<1x32x128xf32>,
    %c0_68 = arith.constant 0 : index
    %c0_69 = arith.constant 0 : index
    %c0_70 = arith.constant 0 : index
    %84 = vector.load %arg12[%c0_68, %c0_69, %c0_70] : memref<1x32x128xf32, #tpu.memory_space<vmem>>, vector<1x17x128xf32>
    %c0_71 = arith.constant 0 : index
    %c1_72 = arith.constant 1 : index
    %c0_73 = arith.constant 0 : index
    %85 = vector.load %arg12[%c0_71, %c1_72, %c0_73] : memref<1x32x128xf32, #tpu.memory_space<vmem>>, vector<1x17x128xf32>
    %86 = arith.maximumf %84, %85 : vector<1x17x128xf32>
    %c0_74 = arith.constant 0 : index
    %c7_75 = arith.constant 7 : index
    %c0_76 = arith.constant 0 : index
    %87 = vector.load %arg12[%c0_74, %c7_75, %c0_76] : memref<1x32x128xf32, #tpu.memory_space<vmem>>, vector<1x17x128xf32>
    %c0_77 = arith.constant 0 : index
    %c8_78 = arith.constant 8 : index
    %c0_79 = arith.constant 0 : index
    %88 = vector.load %arg12[%c0_77, %c8_78, %c0_79] : memref<1x32x128xf32, #tpu.memory_space<vmem>>, vector<1x17x128xf32>
    %89 = arith.maximumf %87, %88 : vector<1x17x128xf32>
    %90 = arith.maximumf %86, %89 : vector<1x17x128xf32>
    %cst_80 = arith.constant 0.000000e+00 : f32
    %91 = vector.broadcast %cst_80 : f32 to vector<1x128xf32>
    %92 = vector.extract_strided_slice %90 {offsets = [0, 0, 0], sizes = [1, 1, 128], strides = [1, 1, 1]} : vector<1x17x128xf32> to vector<1x1x128xf32>
    %93 = vector.shape_cast %92 : vector<1x1x128xf32> to vector<1x128xf32>
    %c0_81 = arith.constant 0 : index
    %c0_82 = arith.constant 0 : index
    %c0_83 = arith.constant 0 : index
    %94 = vector.load %arg6[%c0_81, %c0_82, %c0_83] : memref<4x128x128xf32, #tpu.memory_space<vmem>>, vector<1x128x128xf32>
    %95 = vector.shape_cast %94 : vector<1x128x128xf32> to vector<128x128xf32>
    %cst_84 = arith.constant dense<0.000000e+00> : vector<1x128xf32>
    %96 = tpu.matmul %93, %95, %cst_84 {dimension_numbers = #tpu.dot_dimension_numbers<[1], [0], [0], [1], [0, 0, 1, 1], [], []>} : vector<1x128xf32>, vector<128x128xf32>, vector<1x128xf32> -> vector<1x128xf32>
    %97 = arith.addf %91, %96 : vector<1x128xf32>
    %98 = vector.extract_strided_slice %90 {offsets = [0, 2, 0], sizes = [1, 1, 128], strides = [1, 1, 1]} : vector<1x17x128xf32> to vector<1x1x128xf32>
    %99 = vector.shape_cast %98 : vector<1x1x128xf32> to vector<1x128xf32>
    %c1_85 = arith.constant 1 : index
    %c0_86 = arith.constant 0 : index
    %c0_87 = arith.constant 0 : index
    %100 = vector.load %arg6[%c1_85, %c0_86, %c0_87] : memref<4x128x128xf32, #tpu.memory_space<vmem>>, vector<1x128x128xf32>
    %101 = vector.shape_cast %100 : vector<1x128x128xf32> to vector<128x128xf32>
    %cst_88 = arith.constant dense<0.000000e+00> : vector<1x128xf32>
    %102 = tpu.matmul %99, %101, %cst_88 {dimension_numbers = #tpu.dot_dimension_numbers<[1], [0], [0], [1], [0, 0, 1, 1], [], []>} : vector<1x128xf32>, vector<128x128xf32>, vector<1x128xf32> -> vector<1x128xf32>
    %103 = arith.addf %97, %102 : vector<1x128xf32>
    %104 = vector.extract_strided_slice %90 {offsets = [0, 14, 0], sizes = [1, 1, 128], strides = [1, 1, 1]} : vector<1x17x128xf32> to vector<1x1x128xf32>
    %105 = vector.shape_cast %104 : vector<1x1x128xf32> to vector<1x128xf32>
    %c2_89 = arith.constant 2 : index
    %c0_90 = arith.constant 0 : index
    %c0_91 = arith.constant 0 : index
    %106 = vector.load %arg6[%c2_89, %c0_90, %c0_91] : memref<4x128x128xf32, #tpu.memory_space<vmem>>, vector<1x128x128xf32>
    %107 = vector.shape_cast %106 : vector<1x128x128xf32> to vector<128x128xf32>
    %cst_92 = arith.constant dense<0.000000e+00> : vector<1x128xf32>
    %108 = tpu.matmul %105, %107, %cst_92 {dimension_numbers = #tpu.dot_dimension_numbers<[1], [0], [0], [1], [0, 0, 1, 1], [], []>} : vector<1x128xf32>, vector<128x128xf32>, vector<1x128xf32> -> vector<1x128xf32>
    %109 = arith.addf %103, %108 : vector<1x128xf32>
    %110 = vector.extract_strided_slice %90 {offsets = [0, 16, 0], sizes = [1, 1, 128], strides = [1, 1, 1]} : vector<1x17x128xf32> to vector<1x1x128xf32>
    %111 = vector.shape_cast %110 : vector<1x1x128xf32> to vector<1x128xf32>
    %c3_93 = arith.constant 3 : index
    %c0_94 = arith.constant 0 : index
    %c0_95 = arith.constant 0 : index
    %112 = vector.load %arg6[%c3_93, %c0_94, %c0_95] : memref<4x128x128xf32, #tpu.memory_space<vmem>>, vector<1x128x128xf32>
    %113 = vector.shape_cast %112 : vector<1x128x128xf32> to vector<128x128xf32>
    %cst_96 = arith.constant dense<0.000000e+00> : vector<1x128xf32>
    %114 = tpu.matmul %111, %113, %cst_96 {dimension_numbers = #tpu.dot_dimension_numbers<[1], [0], [0], [1], [0, 0, 1, 1], [], []>} : vector<1x128xf32>, vector<128x128xf32>, vector<1x128xf32> -> vector<1x128xf32>
    %115 = arith.addf %109, %114 : vector<1x128xf32>
    %c0_97 = arith.constant 0 : index
    %c0_98 = arith.constant 0 : index
    %116 = vector.load %arg7[%c0_97, %c0_98] : memref<1x128xf32, #tpu.memory_space<vmem>>, vector<1x128xf32>
    %117 = arith.addf %115, %116 : vector<1x128xf32>
    %cst_99 = arith.constant 0.000000e+00 : f32
    %118 = vector.broadcast %cst_99 : f32 to vector<1x128xf32>
    %119 = arith.maximumf %117, %118 : vector<1x128xf32>
    %c0_100 = arith.constant 0 : index
    %c0_101 = arith.constant 0 : index
    %120 = vector.load %arg8[%c0_100, %c0_101] : memref<128x128xf32, #tpu.memory_space<vmem>>, vector<128x128xf32>
    %cst_102 = arith.constant dense<0.000000e+00> : vector<1x128xf32>
    %121 = tpu.matmul %119, %120, %cst_102 {dimension_numbers = #tpu.dot_dimension_numbers<[1], [0], [0], [1], [0, 0, 1, 1], [], []>} : vector<1x128xf32>, vector<128x128xf32>, vector<1x128xf32> -> vector<1x128xf32>
    %c0_103 = arith.constant 0 : index
    %c0_104 = arith.constant 0 : index
    %122 = vector.load %arg9[%c0_103, %c0_104] : memref<1x128xf32, #tpu.memory_space<vmem>>, vector<1x128xf32>
    %123 = arith.addf %121, %122 : vector<1x128xf32>
    %c0_105 = arith.constant 0 : index
    %c0_106 = arith.constant 0 : index
    %c0_107 = arith.constant 0 : index
    %124 = vector.load %arg10[%c0_105, %c0_106, %c0_107] : memref<1x1x128xf32, #tpu.memory_space<vmem>>, vector<1x1x128xf32>
    %125 = vector.shape_cast %124 : vector<1x1x128xf32> to vector<1x128xf32>
    %126 = vector.shape_cast %123 : vector<1x128xf32> to vector<1x1x128xf32>
    tpu.vector_store %arg10[%c0_105, %c0_106, %c0_107], %126 {strides = array<i32>} : memref<1x1x128xf32, #tpu.memory_space<vmem>>, vector<1x1x128xf32>,
    return
  }
  func.func @transform_0(%arg0: i32) -> (i32, i32, i32) {
    %c0_i32 = arith.constant 0 : i32
    %c0_i32_0 = arith.constant 0 : i32
    %c0_i32_1 = arith.constant 0 : i32
    return %arg0, %c0_i32, %c0_i32_0 : i32, i32, i32
  }
  func.func @transform_1(%arg0: i32) -> (i32, i32) {
    %c0_i32 = arith.constant 0 : i32
    %c0_i32_0 = arith.constant 0 : i32
    %c0_i32_1 = arith.constant 0 : i32
    return %c0_i32, %c0_i32_0 : i32, i32
  }
  func.func @transform_2(%arg0: i32) -> (i32, i32) {
    %c0_i32 = arith.constant 0 : i32
    %c0_i32_0 = arith.constant 0 : i32
    %c0_i32_1 = arith.constant 0 : i32
    return %c0_i32, %c0_i32_0 : i32, i32
  }
  func.func @transform_3(%arg0: i32) -> (i32, i32, i32) {
    %c0_i32 = arith.constant 0 : i32
    %c0_i32_0 = arith.constant 0 : i32
    %c0_i32_1 = arith.constant 0 : i32
    %c0_i32_2 = arith.constant 0 : i32
    return %c0_i32, %c0_i32_0, %c0_i32_1 : i32, i32, i32
  }
  func.func @transform_4(%arg0: i32) -> (i32, i32) {
    %c0_i32 = arith.constant 0 : i32
    %c0_i32_0 = arith.constant 0 : i32
    %c0_i32_1 = arith.constant 0 : i32
    return %c0_i32, %c0_i32_0 : i32, i32
  }
  func.func @transform_5(%arg0: i32) -> (i32, i32, i32) {
    %c0_i32 = arith.constant 0 : i32
    %c0_i32_0 = arith.constant 0 : i32
    %c0_i32_1 = arith.constant 0 : i32
    %c0_i32_2 = arith.constant 0 : i32
    return %c0_i32, %c0_i32_0, %c0_i32_1 : i32, i32, i32
  }
  func.func @transform_6(%arg0: i32) -> (i32, i32) {
    %c0_i32 = arith.constant 0 : i32
    %c0_i32_0 = arith.constant 0 : i32
    %c0_i32_1 = arith.constant 0 : i32
    return %c0_i32, %c0_i32_0 : i32, i32
  }
  func.func @transform_7(%arg0: i32) -> (i32, i32) {
    %c0_i32 = arith.constant 0 : i32
    %c0_i32_0 = arith.constant 0 : i32
    %c0_i32_1 = arith.constant 0 : i32
    return %c0_i32, %c0_i32_0 : i32, i32
  }
  func.func @transform_8(%arg0: i32) -> (i32, i32) {
    %c0_i32 = arith.constant 0 : i32
    %c0_i32_0 = arith.constant 0 : i32
    %c0_i32_1 = arith.constant 0 : i32
    return %c0_i32, %c0_i32_0 : i32, i32
  }
  func.func @transform_9(%arg0: i32) -> (i32, i32, i32) {
    %c0_i32 = arith.constant 0 : i32
    %c0_i32_0 = arith.constant 0 : i32
    %c0_i32_1 = arith.constant 0 : i32
    return %arg0, %c0_i32, %c0_i32_0 : i32, i32, i32
  }
}

</mosaic_0001>

<llo_original>
// kernel: cnn_forward.1
$region0: #{cnn_forward.1}
  #allocation0 [shape = 'u32[]', space=smem, size = 0x4, offset = 0x4, fixed_abs, tag = 'smem constant byte address 0x4 - core index']
  #allocation1 [shape = 'u32[144,128]{1,0:T(1,128)}', space=vmem, size = 0x12000, scoped, tag = 'internal scratch']
  #allocation2 [shape = 'f32[1,56,128]{2,1,0:T(8,128)}', space=vmem, size = 0x7000, scoped, tag = 'scratch operand']
  #allocation3 [shape = 'f32[1,32,128]{2,1,0:T(8,128)}', space=vmem, size = 0x4000, scoped, tag = 'scratch operand']
  %s0 = inlined_call_operand.vmem [shape: f32[2,224,128], index: 0, kind: input, shape index: {}]
  %s1 = inlined_call_operand.vmem [shape: f32[128,128], index: 1, kind: input, shape index: {}]
  %s2 = inlined_call_operand.vmem [shape: f32[1,128], index: 2, kind: input, shape index: {}]
  %s3 = inlined_call_operand.vmem [shape: f32[9,128,128], index: 3, kind: input, shape index: {}]
  %s4 = inlined_call_operand.vmem [shape: f32[1,128], index: 4, kind: input, shape index: {}]
  %s5 = inlined_call_operand.vmem [shape: f32[4,128,128], index: 5, kind: input, shape index: {}]
  %s6 = inlined_call_operand.vmem [shape: f32[1,128], index: 6, kind: input, shape index: {}]
  %s7 = inlined_call_operand.vmem [shape: f32[128,128], index: 7, kind: input, shape index: {}]
  %s8 = inlined_call_operand.vmem [shape: f32[1,128], index: 8, kind: input, shape index: {}]
  %s9 = inlined_call_operand.hbm [shape: f32[2,1,128], index: 9, kind: output, shape index: {}]
  %s10 = sld [smem:[#allocation0]]
  $region69: #{cnn_forward.1} parent=0
    _
  %s12 = ssub.s32 1, %s10
  %s13 = scalar_select 0, %s12, %s10
  $region1: #{cnn_forward.1} parent=0
    #allocation4 [shape = 'u8[1024]{0}', space=vmem, size = 0x400, scoped, tag = 'output window, operand 0']
    #allocation5 [shape = 's32[2]{0}', space=sflag, size = 0x8, scoped, tag = 'scoped memory for cnn_forward.1']
    %14 = vsyncpa [#allocation5], 0
    %s15 = scalar_lea.sflag [#allocation5], 1
    %16 = vsyncpa %s15, 0
    loop: start=0, step=1, limit=4
    $region2: #{cnn_forward.1} parent=1 // loop_pre_header
      _
    $region3: #{cnn_forward.1} parent=1 // loop_header
      %s18 = sphi 0, %s22
      %p19 = scmp.ge.s32.totalorder %s18, 4
      %s28 = sphi 0, %s30
      %s31 = sphi 0, %s28
      %s32 = sphi 0, %s31
      %s48 = sphi 0, %s32
      %s52 = sphi 0, %s52
      %s54 = sphi 0, %s52
      %s55 = sphi 0, %s54
      %s69 = sphi 0, %s55
      %s73 = sphi 0, %s73
      %s75 = sphi 0, %s73
      %s76 = sphi 0, %s75
      %s90 = sphi 0, %s76
      %s94 = sphi 0, %s94
      %s96 = sphi 0, %s94
      %s97 = sphi 0, %s96
      %s111 = sphi 0, %s97
      %s115 = sphi 0, %s115
      %s117 = sphi 0, %s115
      %s118 = sphi 0, %s117
      %s132 = sphi 0, %s118
      %s136 = sphi 0, %s136
      %s138 = sphi 0, %s136
      %s139 = sphi 0, %s138
      %s153 = sphi 0, %s139
      %s157 = sphi 0, %s157
      %s159 = sphi 0, %s157
      %s160 = sphi 0, %s159
      %s174 = sphi 0, %s160
      %s178 = sphi 0, %s178
      %s180 = sphi 0, %s178
      %s181 = sphi 0, %s180
      %s195 = sphi 0, %s181
      %s199 = sphi 0, %s199
      %s201 = sphi 0, %s199
      %s202 = sphi 0, %s201
      %s216 = sphi 0, %s202
      %s222 = sphi 0, %s224
      %s225 = sphi 0, %s222
      %s226 = sphi 0, %s225
      %s242 = sphi 0, %s226
    $region4: #{cnn_forward.1} parent=1 // loop_header_branch
      %21 = sbr.rel (%p19) target = $region8
    $region5: #{cnn_forward.1} parent=1 // loop_body
      %s23 = ssub.s32 %s18, 1
      %s24 = ssub.s32 %s18, 2
      %s25 = sadd.s32 %s18, 1
      %s26 = ssub.s32 %s18, %s25
      %p27 = scmp.eq.s32.totalorder %s26, 0
      %s29 = sadd.s32 %s28, 1
      %s30 = scalar_select %p27, %s28, %s29
      %p33 = pneg %p27
      %p34 = scmp.eq.s32.totalorder %s18, 1
      %p35 = por %p33, %p34
      %p36 = scmp.ne.s32.totalorder %s28, %s31
      %p37 = scmp.eq.s32.totalorder %s18, 0
      %p38 = por %p36, %p37
      %p39 = scmp.ne.s32.totalorder %s28, %s31
      %p40 = scmp.eq.s32.totalorder %s23, 1
      %p41 = por %p39, %p40
      %p42 = scmp.ne.s32.totalorder %s31, %s32
      %p43 = scmp.eq.s32.totalorder %s23, 0
      %p44 = por %p42, %p43
      %p45 = scmp.ne.s32.totalorder %s31, %s32
      %p46 = scmp.eq.s32.totalorder %s24, 1
      %p47 = por %p45, %p46
      %p49 = scmp.ne.s32.totalorder %s32, %s48
      %p50 = scmp.eq.s32.totalorder %s24, 0
      %p51 = por %p49, %p50
      %s53 = sadd.s32 %s52, 1
      %p56 = scmp.eq.s32.totalorder %s18, 1
      %p57 = scmp.ne.s32.totalorder %s52, %s54
      %p58 = scmp.eq.s32.totalorder %s18, 0
      %p59 = por %p57, %p58
      %p60 = scmp.ne.s32.totalorder %s52, %s54
      %p61 = scmp.eq.s32.totalorder %s23, 1
      %p62 = por %p60, %p61
      %p63 = scmp.ne.s32.totalorder %s54, %s55
      %p64 = scmp.eq.s32.totalorder %s23, 0
      %p65 = por %p63, %p64
      %p66 = scmp.ne.s32.totalorder %s54, %s55
      %p67 = scmp.eq.s32.totalorder %s24, 1
      %p68 = por %p66, %p67
      %p70 = scmp.ne.s32.totalorder %s55, %s69
      %p71 = scmp.eq.s32.totalorder %s24, 0
      %p72 = por %p70, %p71
      %s74 = sadd.s32 %s73, 1
      %p77 = scmp.eq.s32.totalorder %s18, 1
      %p78 = scmp.ne.s32.totalorder %s73, %s75
      %p79 = scmp.eq.s32.totalorder %s18, 0
      %p80 = por %p78, %p79
      %p81 = scmp.ne.s32.totalorder %s73, %s75
      %p82 = scmp.eq.s32.totalorder %s23, 1
      %p83 = por %p81, %p82
      %p84 = scmp.ne.s32.totalorder %s75, %s76
      %p85 = scmp.eq.s32.totalorder %s23, 0
      %p86 = por %p84, %p85
      %p87 = scmp.ne.s32.totalorder %s75, %s76
      %p88 = scmp.eq.s32.totalorder %s24, 1
      %p89 = por %p87, %p88
      %p91 = scmp.ne.s32.totalorder %s76, %s90
      %p92 = scmp.eq.s32.totalorder %s24, 0
      %p93 = por %p91, %p92
      %s95 = sadd.s32 %s94, 1
      %p98 = scmp.eq.s32.totalorder %s18, 1
      %p99 = scmp.ne.s32.totalorder %s94, %s96
      %p100 = scmp.eq.s32.totalorder %s18, 0
      %p101 = por %p99, %p100
      %p102 = scmp.ne.s32.totalorder %s94, %s96
      %p103 = scmp.eq.s32.totalorder %s23, 1
      %p104 = por %p102, %p103
      %p105 = scmp.ne.s32.totalorder %s96, %s97
      %p106 = scmp.eq.s32.totalorder %s23, 0
      %p107 = por %p105, %p106
      %p108 = scmp.ne.s32.totalorder %s96, %s97
      %p109 = scmp.eq.s32.totalorder %s24, 1
      %p110 = por %p108, %p109
      %p112 = scmp.ne.s32.totalorder %s97, %s111
      %p113 = scmp.eq.s32.totalorder %s24, 0
      %p114 = por %p112, %p113
      %s116 = sadd.s32 %s115, 1
      %p119 = scmp.eq.s32.totalorder %s18, 1
      %p120 = scmp.ne.s32.totalorder %s115, %s117
      %p121 = scmp.eq.s32.totalorder %s18, 0
      %p122 = por %p120, %p121
      %p123 = scmp.ne.s32.totalorder %s115, %s117
      %p124 = scmp.eq.s32.totalorder %s23, 1
      %p125 = por %p123, %p124
      %p126 = scmp.ne.s32.totalorder %s117, %s118
      %p127 = scmp.eq.s32.totalorder %s23, 0
      %p128 = por %p126, %p127
      %p129 = scmp.ne.s32.totalorder %s117, %s118
      %p130 = scmp.eq.s32.totalorder %s24, 1
      %p131 = por %p129, %p130
      %p133 = scmp.ne.s32.totalorder %s118, %s132
      %p134 = scmp.eq.s32.totalorder %s24, 0
      %p135 = por %p133, %p134
      %s137 = sadd.s32 %s136, 1
      %p140 = scmp.eq.s32.totalorder %s18, 1
      %p141 = scmp.ne.s32.totalorder %s136, %s138
      %p142 = scmp.eq.s32.totalorder %s18, 0
      %p143 = por %p141, %p142
      %p144 = scmp.ne.s32.totalorder %s136, %s138
      %p145 = scmp.eq.s32.totalorder %s23, 1
      %p146 = por %p144, %p145
      %p147 = scmp.ne.s32.totalorder %s138, %s139
      %p148 = scmp.eq.s32.totalorder %s23, 0
      %p149 = por %p147, %p148
      %p150 = scmp.ne.s32.totalorder %s138, %s139
      %p151 = scmp.eq.s32.totalorder %s24, 1
      %p152 = por %p150, %p151
      %p154 = scmp.ne.s32.totalorder %s139, %s153
      %p155 = scmp.eq.s32.totalorder %s24, 0
      %p156 = por %p154, %p155
      %s158 = sadd.s32 %s157, 1
      %p161 = scmp.eq.s32.totalorder %s18, 1
      %p162 = scmp.ne.s32.totalorder %s157, %s159
      %p163 = scmp.eq.s32.totalorder %s18, 0
      %p164 = por %p162, %p163
      %p165 = scmp.ne.s32.totalorder %s157, %s159
      %p166 = scmp.eq.s32.totalorder %s23, 1
      %p167 = por %p165, %p166
      %p168 = scmp.ne.s32.totalorder %s159, %s160
      %p169 = scmp.eq.s32.totalorder %s23, 0
      %p170 = por %p168, %p169
      %p171 = scmp.ne.s32.totalorder %s159, %s160
      %p172 = scmp.eq.s32.totalorder %s24, 1
      %p173 = por %p171, %p172
      %p175 = scmp.ne.s32.totalorder %s160, %s174
      %p176 = scmp.eq.s32.totalorder %s24, 0
      %p177 = por %p175, %p176
      %s179 = sadd.s32 %s178, 1
      %p182 = scmp.eq.s32.totalorder %s18, 1
      %p183 = scmp.ne.s32.totalorder %s178, %s180
      %p184 = scmp.eq.s32.totalorder %s18, 0
      %p185 = por %p183, %p184
      %p186 = scmp.ne.s32.totalorder %s178, %s180
      %p187 = scmp.eq.s32.totalorder %s23, 1
      %p188 = por %p186, %p187
      %p189 = scmp.ne.s32.totalorder %s180, %s181
      %p190 = scmp.eq.s32.totalorder %s23, 0
      %p191 = por %p189, %p190
      %p192 = scmp.ne.s32.totalorder %s180, %s181
      %p193 = scmp.eq.s32.totalorder %s24, 1
      %p194 = por %p192, %p193
      %p196 = scmp.ne.s32.totalorder %s181, %s195
      %p197 = scmp.eq.s32.totalorder %s24, 0
      %p198 = por %p196, %p197
      %s200 = sadd.s32 %s199, 1
      %p203 = scmp.eq.s32.totalorder %s18, 1
      %p204 = scmp.ne.s32.totalorder %s199, %s201
      %p205 = scmp.eq.s32.totalorder %s18, 0
      %p206 = por %p204, %p205
      %p207 = scmp.ne.s32.totalorder %s199, %s201
      %p208 = scmp.eq.s32.totalorder %s23, 1
      %p209 = por %p207, %p208
      %p210 = scmp.ne.s32.totalorder %s201, %s202
      %p211 = scmp.eq.s32.totalorder %s23, 0
      %p212 = por %p210, %p211
      %p213 = scmp.ne.s32.totalorder %s201, %s202
      %p214 = scmp.eq.s32.totalorder %s24, 1
      %p215 = por %p213, %p214
      %p217 = scmp.ne.s32.totalorder %s202, %s216
      %p218 = scmp.eq.s32.totalorder %s24, 0
      %p219 = por %p217, %p218
      %s220 = ssub.s32 %s18, %s25
      %p221 = scmp.eq.s32.totalorder %s220, 0
      %s223 = sadd.s32 %s222, 1
      %s224 = scalar_select %p221, %s222, %s223
      %p227 = pneg %p221
      %p228 = scmp.eq.s32.totalorder %s18, 1
      %p229 = por %p227, %p228
      %p230 = scmp.ne.s32.totalorder %s222, %s225
      %p231 = scmp.eq.s32.totalorder %s18, 0
      %p232 = por %p230, %p231
      %p233 = scmp.ne.s32.totalorder %s222, %s225
      %p234 = scmp.eq.s32.totalorder %s23, 1
      %p235 = por %p233, %p234
      %p236 = scmp.ne.s32.totalorder %s225, %s226
      %p237 = scmp.eq.s32.totalorder %s23, 0
      %p238 = por %p236, %p237
      %p239 = scmp.ne.s32.totalorder %s225, %s226
      %p240 = scmp.eq.s32.totalorder %s24, 1
      %p241 = por %p239, %p240
      %p243 = scmp.ne.s32.totalorder %s226, %s242
      %p244 = scmp.eq.s32.totalorder %s24, 0
      %p245 = por %p243, %p244
      %p246 = scmp.le.s32.totalorder 1, %s18
      %p247 = scmp.lt.s32.totalorder %s18, 3
      %p248 = pnand %p246, %p247
      %p249 = pneg %p248
      // Predicated region
      $region9: #{cnn_forward.1} parent=5 // pred_check
        _
      $region10: #{cnn_forward.1} parent=5 // pred_check_branch
        %251 = sbr.rel (%p248) target = $region12
      $region11: #{cnn_forward.1} parent=5 // pred_region
        %s252 = ssub.s32 %s18, 1
        // Predicated region
        $region13: #{cnn_forward.1} parent=11 // pred_check
          %p253 = pneg %p65
        $region14: #{cnn_forward.1} parent=11 // pred_check_branch
          %255 = sbr.rel (%p253) target = $region16
        $region15: #{cnn_forward.1} parent=11 // pred_region
          _
        $region16: #{cnn_forward.1} parent=11 // pred_fallthru
          _
        // Predicated region
        $region17: #{cnn_forward.1} parent=11 // pred_check
          %p256 = pneg %p86
        $region18: #{cnn_forward.1} parent=11 // pred_check_branch
          %258 = sbr.rel (%p256) target = $region20
        $region19: #{cnn_forward.1} parent=11 // pred_region
          _
        $region20: #{cnn_forward.1} parent=11 // pred_fallthru
          _
        // Predicated region
        $region21: #{cnn_forward.1} parent=11 // pred_check
          %p259 = pneg %p107
        $region22: #{cnn_forward.1} parent=11 // pred_check_branch
          %261 = sbr.rel (%p259) target = $region24
        $region23: #{cnn_forward.1} parent=11 // pred_region
          _
        $region24: #{cnn_forward.1} parent=11 // pred_fallthru
          _
        // Predicated region
        $region25: #{cnn_forward.1} parent=11 // pred_check
          %p262 = pneg %p128
        $region26: #{cnn_forward.1} parent=11 // pred_check_branch
          %264 = sbr.rel (%p262) target = $region28
        $region27: #{cnn_forward.1} parent=11 // pred_region
          _
        $region28: #{cnn_forward.1} parent=11 // pred_fallthru
          _
        // Predicated region
        $region29: #{cnn_forward.1} parent=11 // pred_check
          %p265 = pneg %p149
        $region30: #{cnn_forward.1} parent=11 // pred_check_branch
          %267 = sbr.rel (%p265) target = $region32
        $region31: #{cnn_forward.1} parent=11 // pred_region
          _
        $region32: #{cnn_forward.1} parent=11 // pred_fallthru
          _
        // Predicated region
        $region33: #{cnn_forward.1} parent=11 // pred_check
          %p268 = pneg %p170
        $region34: #{cnn_forward.1} parent=11 // pred_check_branch
          %270 = sbr.rel (%p268) target = $region36
        $region35: #{cnn_forward.1} parent=11 // pred_region
          _
        $region36: #{cnn_forward.1} parent=11 // pred_fallthru
          _
        // Predicated region
        $region37: #{cnn_forward.1} parent=11 // pred_check
          %p271 = pneg %p191
        $region38: #{cnn_forward.1} parent=11 // pred_check_branch
          %273 = sbr.rel (%p271) target = $region40
        $region39: #{cnn_forward.1} parent=11 // pred_region
          _
        $region40: #{cnn_forward.1} parent=11 // pred_fallthru
          _
        // Predicated region
        $region41: #{cnn_forward.1} parent=11 // pred_check
          %p274 = pneg %p212
        $region42: #{cnn_forward.1} parent=11 // pred_check_branch
          %276 = sbr.rel (%p274) target = $region44
        $region43: #{cnn_forward.1} parent=11 // pred_region
          _
        $region44: #{cnn_forward.1} parent=11 // pred_fallthru
          _
      $region12: #{cnn_forward.1} parent=5 // pred_fallthru
        _
      %p277 = scmp.lt.s32.totalorder %s18, 2
      // Predicated region
      $region45: #{cnn_forward.1} parent=5 // pred_check
        %p278 = pneg %p277
      $region46: #{cnn_forward.1} parent=5 // pred_check_branch
        %280 = sbr.rel (%p278) target = $region48
      $region47: #{cnn_forward.1} parent=5 // pred_region
        // Predicated region
        $region49: #{cnn_forward.1} parent=47 // pred_check
          %p281 = pneg %p38
        $region50: #{cnn_forward.1} parent=47 // pred_check_branch
          %283 = sbr.rel (%p281) target = $region52
        $region51: #{cnn_forward.1} parent=47 // pred_region
          %p284 = scmp.lt.s32.totalorder %s18, 1
          %s285 = scalar_select %p284, %s18, 1
          %s286 = smul.addr %s285, 28
          %s287 = smul.addr %s286, 8
          %s288 = scalar_lea.vmem %s0, %s287
        $region52: #{cnn_forward.1} parent=47 // pred_fallthru
          _
      $region48: #{cnn_forward.1} parent=5 // pred_fallthru
        _
      %p289 = scmp.le.s32.totalorder 1, %s18
      %p290 = scmp.lt.s32.totalorder %s18, 3
      %p291 = pnand %p289, %p290
      %p292 = pneg %p291
      // Predicated region
      $region53: #{cnn_forward.1} parent=5 // pred_check
        _
      $region54: #{cnn_forward.1} parent=5 // pred_check_branch
        %294 = sbr.rel (%p291) target = $region56
      $region55: #{cnn_forward.1} parent=5 // pred_region
        %s295 = ssub.s32 %s18, 1
        %p296 = scmp.lt.s32.totalorder %s23, 1
        %s297 = scalar_select %p296, %s23, 1
        %s298 = smul.addr %s297, 28
        %s299 = smul.addr %s298, 8
        %s300 = scalar_lea.vmem %s0, %s299
        %p301 = pneg %p44
        %p302 = pneg %p41
        %p303 = pneg %p65
        %p304 = pneg %p62
        %p305 = pneg %p86
        %p306 = pneg %p83
        %p307 = pneg %p107
        %p308 = pneg %p104
        %p309 = pneg %p128
        %p310 = pneg %p125
        %p311 = pneg %p149
        %p312 = pneg %p146
        %p313 = pneg %p170
        %p314 = pneg %p167
        %p315 = pneg %p191
        %p316 = pneg %p188
        %p317 = pneg %p212
        %p318 = pneg %p209
        %p319 = pneg %p238
        %p320 = pneg %p235
        %s321 = sand.u32 %s225, 1
        %s322 = scalar_lea.sflag [#allocation5], %s321
        %s323 = sand.u32 %s225, 1
        %s324 = scalar_lea.vmem [#allocation4], %s323
        %p325 = scmp.lt.s32.totalorder %s23, 1
        %s326 = scalar_select %p325, %s23, 1
        %s327 = smul.addr %s326, 28
        %s328 = smul.addr %s327, 8
        %s329 = scalar_lea.vmem %s0, %s328
        %v330 = vld [vmem:[%s329] sm:$0xff]
        %v331 = vld [vmem:[%s329 + $0x8] sm:$0xff]
        %v332 = vld [vmem:[%s329 + $0x10] sm:$0xff]
        %v333 = vld [vmem:[%s329 + $0x18] sm:$0xff]
        %v334 = vld [vmem:[%s329 + $0x20] sm:$0xff]
        %v335 = vld [vmem:[%s329 + $0x28] sm:$0xff]
        %v336 = vld [vmem:[%s329 + $0x30] sm:$0xff]
        %v337 = vld [vmem:[%s329 + $0x38] sm:$0xff]
        %v338 = vld [vmem:[%s329 + $0x40] sm:$0xff]
        %v339 = vld [vmem:[%s329 + $0x48] sm:$0xff]
        %v340 = vld [vmem:[%s329 + $0x50] sm:$0xff]
        %v341 = vld [vmem:[%s329 + $0x58] sm:$0xff]
        %v342 = vld [vmem:[%s329 + $0x60] sm:$0xff]
        %v343 = vld [vmem:[%s329 + $0x68] sm:$0xff]
        %v344 = vld [vmem:[%s329 + $0x70] sm:$0xff]
        %v345 = vld [vmem:[%s329 + $0x78] sm:$0xff]
        %v346 = vld [vmem:[%s329 + $0x80] sm:$0xff]
        %v347 = vld [vmem:[%s329 + $0x88] sm:$0xff]
        %v348 = vld [vmem:[%s329 + $0x90] sm:$0xff]
        %v349 = vld [vmem:[%s329 + $0x98] sm:$0xff]
        %v350 = vld [vmem:[%s329 + $0xa0] sm:$0xff]
        %v351 = vld [vmem:[%s329 + $0xa8] sm:$0xff]
        %v352 = vld [vmem:[%s329 + $0xb0] sm:$0xff]
        %v353 = vld [vmem:[%s329 + $0xb8] sm:$0xff]
        %v354 = vld [vmem:[%s329 + $0xc0] sm:$0xff]
        %v355 = vld [vmem:[%s329 + $0xc8] sm:$0xff]
        %v356 = vld [vmem:[%s329 + $0xd0] sm:$0xff]
        %v357 = vld [vmem:[%s329 + $0xd8] sm:$0xff]
        %v358 = vld [vmem:[%s1] sm:$0xff]
        %v359 = vld [vmem:[%s1 + $0x8] sm:$0xff]
        %v360 = vld [vmem:[%s1 + $0x10] sm:$0xff]
        %v361 = vld [vmem:[%s1 + $0x18] sm:$0xff]
        %v362 = vld [vmem:[%s1 + $0x20] sm:$0xff]
        %v363 = vld [vmem:[%s1 + $0x28] sm:$0xff]
        %v364 = vld [vmem:[%s1 + $0x30] sm:$0xff]
        %v365 = vld [vmem:[%s1 + $0x38] sm:$0xff]
        %v366 = vld [vmem:[%s1 + $0x40] sm:$0xff]
        %v367 = vld [vmem:[%s1 + $0x48] sm:$0xff]
        %v368 = vld [vmem:[%s1 + $0x50] sm:$0xff]
        %v369 = vld [vmem:[%s1 + $0x58] sm:$0xff]
        %v370 = vld [vmem:[%s1 + $0x60] sm:$0xff]
        %v371 = vld [vmem:[%s1 + $0x68] sm:$0xff]
        %v372 = vld [vmem:[%s1 + $0x70] sm:$0xff]
        %v373 = vld [vmem:[%s1 + $0x78] sm:$0xff]
        %v374 = vld [vmem:[%s2] sm:$0x1]
        %v376 = vlaneseq
        %v377 = vshrl.u32 %v376, 7
        %v378 = vsub.s32 0, %v377
        %v379 = vrot.slane %v374, %v378
        %381 = vmatprep.subr.mxu0 0.0
        %382 = vmatpush1.msra.mxu0 %v358
        %383 = vmatprep.subr.mxu0 0.0
        %384 = vmatpush1.msra.mxu0 %v359
        %385 = vmatprep.subr.mxu0 0.0
        %386 = vmatpush1.msra.mxu0 %v360
        %387 = vmatprep.subr.mxu0 0.0
        %388 = vmatpush1.msra.mxu0 %v361
        %389 = vmatprep.subr.mxu0 0.0
        %390 = vmatpush1.msra.mxu0 %v362
        %391 = vmatprep.subr.mxu0 0.0
        %392 = vmatpush1.msra.mxu0 %v363
        %393 = vmatprep.subr.mxu0 0.0
        %394 = vmatpush1.msra.mxu0 %v364
        %395 = vmatprep.subr.mxu0 0.0
        %396 = vmatpush1.msra.mxu0 %v365
        %397 = vmatprep.subr.mxu0 0.0
        %398 = vmatpush1.msra.mxu0 %v366
        %399 = vmatprep.subr.mxu0 0.0
        %400 = vmatpush1.msra.mxu0 %v367
        %401 = vmatprep.subr.mxu0 0.0
        %402 = vmatpush1.msra.mxu0 %v368
        %403 = vmatprep.subr.mxu0 0.0
        %404 = vmatpush1.msra.mxu0 %v369
        %405 = vmatprep.subr.mxu0 0.0
        %406 = vmatpush1.msra.mxu0 %v370
        %407 = vmatprep.subr.mxu0 0.0
        %408 = vmatpush1.msra.mxu0 %v371
        %409 = vmatprep.subr.mxu0 0.0
        %410 = vmatpush1.msra.mxu0 %v372
        %411 = vmatprep.subr.mxu0 0.0
        %412 = vmatpush1.msra.mxu0 %v373
        %413 = vmatprep.subr.mxu0 0.0
        %414 = vmatpush1.msra.mxu0 0.0
        %415 = vmatprep.subr.mxu0 0.0
        %416 = vmatpush1.msra.mxu0 0.0
        %417 = vmatprep.subr.mxu0 0.0
        %418 = vmatpush1.msra.mxu0 0.0
        %419 = vmatprep.subr.mxu0 0.0
        %420 = vmatpush1.msra.mxu0 0.0
        %421 = vmatprep.subr.mxu0 0.0
        %422 = vmatpush1.msra.mxu0 0.0
        %423 = vmatprep.subr.mxu0 0.0
        %424 = vmatpush1.msra.mxu0 0.0
        %425 = vmatprep.subr.mxu0 0.0
        %426 = vmatpush1.msra.mxu0 0.0
        %427 = vmatprep.subr.mxu0 0.0
        %428 = vmatpush1.msra.mxu0 0.0
        %429 = vmatprep.subr.mxu0 0.0
        %430 = vmatpush1.msra.mxu0 0.0
        %431 = vmatprep.subr.mxu0 0.0
        %432 = vmatpush1.msra.mxu0 0.0
        %433 = vmatprep.subr.mxu0 0.0
        %434 = vmatpush1.msra.mxu0 0.0
        %435 = vmatprep.subr.mxu0 0.0
        %436 = vmatpush1.msra.mxu0 0.0
        %437 = vmatprep.subr.mxu0 0.0
        %438 = vmatpush1.msra.mxu0 0.0
        %439 = vmatprep.subr.mxu0 0.0
        %440 = vmatpush1.msra.mxu0 0.0
        %441 = vmatprep.subr.mxu0 0.0
        %442 = vmatpush1.msra.mxu0 0.0
        %443 = vmatprep.subr.mxu0 0.0
        %444 = vmatpush1.msra.mxu0 0.0
        %445 = vmatprep.mubr.f32.mxu0 0.0
        %446 = vmatmul.mubr.f32.gmra.mrb[0].mxu0 %v330
        %v447 = vpop.f32.mrb[0].mxu0
        %v448 = vadd.f32 %v379, %v447
        %v449 = vpop.f32.mrb[0].mxu0
        %450 = vmatprep.mubr.f32.mxu0 0.0
        %451 = vmatmul.mubr.f32.gmra.mrb[0].mxu0 %v331
        %v452 = vpop.f32.mrb[0].mxu0
        %v453 = vadd.f32 %v379, %v452
        %v454 = vpop.f32.mrb[0].mxu0
        %455 = vmatprep.mubr.f32.mxu0 0.0
        %456 = vmatmul.mubr.f32.gmra.mrb[0].mxu0 %v332
        %v457 = vpop.f32.mrb[0].mxu0
        %v458 = vadd.f32 %v379, %v457
        %v459 = vpop.f32.mrb[0].mxu0
        %460 = vmatprep.mubr.f32.mxu0 0.0
        %461 = vmatmul.mubr.f32.gmra.mrb[0].mxu0 %v333
        %v462 = vpop.f32.mrb[0].mxu0
        %v463 = vadd.f32 %v379, %v462
        %v464 = vpop.f32.mrb[0].mxu0
        %465 = vmatprep.mubr.f32.mxu0 0.0
        %466 = vmatmul.mubr.f32.gmra.mrb[0].mxu0 %v334
        %v467 = vpop.f32.mrb[0].mxu0
        %v468 = vadd.f32 %v379, %v467
        %v469 = vpop.f32.mrb[0].mxu0
        %470 = vmatprep.mubr.f32.mxu0 0.0
        %471 = vmatmul.mubr.f32.gmra.mrb[0].mxu0 %v335
        %v472 = vpop.f32.mrb[0].mxu0
        %v473 = vadd.f32 %v379, %v472
        %v474 = vpop.f32.mrb[0].mxu0
        %475 = vmatprep.mubr.f32.mxu0 0.0
        %476 = vmatmul.mubr.f32.gmra.mrb[0].mxu0 %v336
        %v477 = vpop.f32.mrb[0].mxu0
        %v478 = vadd.f32 %v379, %v477
        %v479 = vpop.f32.mrb[0].mxu0
        %480 = vmatprep.mubr.f32.mxu0 0.0
        %481 = vmatmul.mubr.f32.gmra.mrb[0].mxu0 %v337
        %v482 = vpop.f32.mrb[0].mxu0
        %v483 = vadd.f32 %v379, %v482
        %v484 = vpop.f32.mrb[0].mxu0
        %485 = vmatprep.mubr.f32.mxu0 0.0
        %486 = vmatmul.mubr.f32.gmra.mrb[0].mxu0 %v338
        %v487 = vpop.f32.mrb[0].mxu0
        %v488 = vadd.f32 %v379, %v487
        %v489 = vpop.f32.mrb[0].mxu0
        %490 = vmatprep.mubr.f32.mxu0 0.0
        %491 = vmatmul.mubr.f32.gmra.mrb[0].mxu0 %v339
        %v492 = vpop.f32.mrb[0].mxu0
        %v493 = vadd.f32 %v379, %v492
        %v494 = vpop.f32.mrb[0].mxu0
        %495 = vmatprep.mubr.f32.mxu0 0.0
        %496 = vmatmul.mubr.f32.gmra.mrb[0].mxu0 %v340
        %v497 = vpop.f32.mrb[0].mxu0
        %v498 = vadd.f32 %v379, %v497
        %v499 = vpop.f32.mrb[0].mxu0
        %500 = vmatprep.mubr.f32.mxu0 0.0
        %501 = vmatmul.mubr.f32.gmra.mrb[0].mxu0 %v341
        %v502 = vpop.f32.mrb[0].mxu0
        %v503 = vadd.f32 %v379, %v502
        %v504 = vpop.f32.mrb[0].mxu0
        %505 = vmatprep.mubr.f32.mxu0 0.0
        %506 = vmatmul.mubr.f32.gmra.mrb[0].mxu0 %v342
        %v507 = vpop.f32.mrb[0].mxu0
        %v508 = vadd.f32 %v379, %v507
        %v509 = vpop.f32.mrb[0].mxu0
        %510 = vmatprep.mubr.f32.mxu0 0.0
        %511 = vmatmul.mubr.f32.gmra.mrb[0].mxu0 %v343
        %v512 = vpop.f32.mrb[0].mxu0
        %v513 = vadd.f32 %v379, %v512
        %v514 = vpop.f32.mrb[0].mxu0
        %515 = vmatprep.mubr.f32.mxu0 0.0
        %516 = vmatmul.mubr.f32.gmra.mrb[0].mxu0 %v344
        %v517 = vpop.f32.mrb[0].mxu0
        %v518 = vadd.f32 %v379, %v517
        %v519 = vpop.f32.mrb[0].mxu0
        %520 = vmatprep.mubr.f32.mxu0 0.0
        %521 = vmatmul.mubr.f32.gmra.mrb[0].mxu0 %v345
        %v522 = vpop.f32.mrb[0].mxu0
        %v523 = vadd.f32 %v379, %v522
        %v524 = vpop.f32.mrb[0].mxu0
        %525 = vmatprep.mubr.f32.mxu0 0.0
        %526 = vmatmul.mubr.f32.gmra.mrb[0].mxu0 %v346
        %v527 = vpop.f32.mrb[0].mxu0
        %v528 = vadd.f32 %v379, %v527
        %v529 = vpop.f32.mrb[0].mxu0
        %530 = vmatprep.mubr.f32.mxu0 0.0
        %531 = vmatmul.mubr.f32.gmra.mrb[0].mxu0 %v347
        %v532 = vpop.f32.mrb[0].mxu0
        %v533 = vadd.f32 %v379, %v532
        %v534 = vpop.f32.mrb[0].mxu0
        %535 = vmatprep.mubr.f32.mxu0 0.0
        %536 = vmatmul.mubr.f32.gmra.mrb[0].mxu0 %v348
        %v537 = vpop.f32.mrb[0].mxu0
        %v538 = vadd.f32 %v379, %v537
        %v539 = vpop.f32.mrb[0].mxu0
        %540 = vmatprep.mubr.f32.mxu0 0.0
        %541 = vmatmul.mubr.f32.gmra.mrb[0].mxu0 %v349
        %v542 = vpop.f32.mrb[0].mxu0
        %v543 = vadd.f32 %v379, %v542
        %v544 = vpop.f32.mrb[0].mxu0
        %545 = vmatprep.mubr.f32.mxu0 0.0
        %546 = vmatmul.mubr.f32.gmra.mrb[0].mxu0 %v350
        %v547 = vpop.f32.mrb[0].mxu0
        %v548 = vadd.f32 %v379, %v547
        %v549 = vpop.f32.mrb[0].mxu0
        %550 = vmatprep.mubr.f32.mxu0 0.0
        %551 = vmatmul.mubr.f32.gmra.mrb[0].mxu0 %v351
        %v552 = vpop.f32.mrb[0].mxu0
        %v553 = vadd.f32 %v379, %v552
        %v554 = vpop.f32.mrb[0].mxu0
        %555 = vmatprep.mubr.f32.mxu0 0.0
        %556 = vmatmul.mubr.f32.gmra.mrb[0].mxu0 %v352
        %v557 = vpop.f32.mrb[0].mxu0
        %v558 = vadd.f32 %v379, %v557
        %v559 = vpop.f32.mrb[0].mxu0
        %560 = vmatprep.mubr.f32.mxu0 0.0
        %561 = vmatmul.mubr.f32.gmra.mrb[0].mxu0 %v353
        %v562 = vpop.f32.mrb[0].mxu0
        %v563 = vadd.f32 %v379, %v562
        %v564 = vpop.f32.mrb[0].mxu0
        %565 = vmatprep.mubr.f32.mxu0 0.0
        %566 = vmatmul.mubr.f32.gmra.mrb[0].mxu0 %v354
        %v567 = vpop.f32.mrb[0].mxu0
        %v568 = vadd.f32 %v379, %v567
        %v569 = vpop.f32.mrb[0].mxu0
        %570 = vmatprep.mubr.f32.mxu0 0.0
        %571 = vmatmul.mubr.f32.gmra.mrb[0].mxu0 %v355
        %v572 = vpop.f32.mrb[0].mxu0
        %v573 = vadd.f32 %v379, %v572
        %v574 = vpop.f32.mrb[0].mxu0
        %575 = vmatprep.mubr.f32.mxu0 0.0
        %576 = vmatmul.mubr.f32.gmra.mrb[0].mxu0 %v356
        %v577 = vpop.f32.mrb[0].mxu0
        %v578 = vadd.f32 %v379, %v577
        %v579 = vpop.f32.mrb[0].mxu0
        %580 = vmatprep.mubr.f32.mxu0 0.0
        %581 = vmatmul.mubr.f32.gmra.mrb[0].mxu0 %v357
        %v582 = vpop.f32.mrb[0].mxu0
        %v583 = vadd.f32 %v379, %v582
        %v584 = vpop.f32.mrb[0].mxu0
        %585 = vdwg.mxu0
        %v586 = vmax.f32 %v448, 0.0
        %v587 = vmax.f32 %v453, 0.0
        %v588 = vmax.f32 %v458, 0.0
        %v589 = vmax.f32 %v463, 0.0
        %v590 = vmax.f32 %v468, 0.0
        %v591 = vmax.f32 %v473, 0.0
        %v592 = vmax.f32 %v478, 0.0
        %v593 = vmax.f32 %v483, 0.0
        %v594 = vmax.f32 %v488, 0.0
        %v595 = vmax.f32 %v493, 0.0
        %v596 = vmax.f32 %v498, 0.0
        %v597 = vmax.f32 %v503, 0.0
        %v598 = vmax.f32 %v508, 0.0
        %v599 = vmax.f32 %v513, 0.0
        %v600 = vmax.f32 %v518, 0.0
        %v601 = vmax.f32 %v523, 0.0
        %v602 = vmax.f32 %v528, 0.0
        %v603 = vmax.f32 %v533, 0.0
        %v604 = vmax.f32 %v538, 0.0
        %v605 = vmax.f32 %v543, 0.0
        %v606 = vmax.f32 %v548, 0.0
        %v607 = vmax.f32 %v553, 0.0
        %v608 = vmax.f32 %v558, 0.0
        %v609 = vmax.f32 %v563, 0.0
        %v610 = vmax.f32 %v568, 0.0
        %v611 = vmax.f32 %v573, 0.0
        %v612 = vmax.f32 %v578, 0.0
        %v613 = vmax.f32 %v583, 0.0
        %v614 = vmax.f32 %v586, %v593
        %v615 = vmax.f32 %v587, %v594
        %v616 = vmax.f32 %v588, %v595
        %v617 = vmax.f32 %v589, %v596
        %v618 = vmax.f32 %v590, %v597
        %v619 = vmax.f32 %v591, %v598
        %v620 = vmax.f32 %v592, %v599
        %v621 = vmax.f32 %v600, %v607
        %v622 = vmax.f32 %v601, %v608
        %v623 = vmax.f32 %v602, %v609
        %v624 = vmax.f32 %v603, %v610
        %v625 = vmax.f32 %v604, %v611
        %v626 = vmax.f32 %v605, %v612
        %v627 = vmax.f32 %v606, %v613
        %v628 = vmax.f32 %v614, %v621
        %v629 = vmax.f32 %v615, %v622
        %v630 = vmax.f32 %v616, %v623
        %v631 = vmax.f32 %v617, %v624
        %v632 = vmax.f32 %v618, %v625
        %v633 = vmax.f32 %v619, %v626
        %v634 = vmax.f32 %v620, %v627
        %635 = vst [vmem:[#allocation2] sm:$0xff] %v628
        %636 = vst [vmem:[#allocation2 + $0x8] sm:$0xff] %v629
        %637 = vst [vmem:[#allocation2 + $0x10] sm:$0xff] %v630
        %638 = vst [vmem:[#allocation2 + $0x18] sm:$0xff] %v631
        %639 = vst [vmem:[#allocation2 + $0x20] sm:$0xff] %v632
        %640 = vst [vmem:[#allocation2 + $0x28] sm:$0xff] %v633
        %641 = vst [vmem:[#allocation2 + $0x30] sm:$0xff] %v634
        %v642 = vld [vmem:[#allocation2] sm:$0xff]
        %v643 = vld [vmem:[#allocation2 + $0x8] sm:$0xff]
        %v644 = vld [vmem:[#allocation2 + $0x10] sm:$0xff]
        %v645 = vld [vmem:[#allocation2 + $0x18] sm:$0xff]
        %v646 = vld [vmem:[%s3] sm:$0xff]
        %v647 = vld [vmem:[%s3 + $0x8] sm:$0xff]
        %v648 = vld [vmem:[%s3 + $0x10] sm:$0xff]
        %v649 = vld [vmem:[%s3 + $0x18] sm:$0xff]
        %v650 = vld [vmem:[%s3 + $0x20] sm:$0xff]
        %v651 = vld [vmem:[%s3 + $0x28] sm:$0xff]
        %v652 = vld [vmem:[%s3 + $0x30] sm:$0xff]
        %v653 = vld [vmem:[%s3 + $0x38] sm:$0xff]
        %v654 = vld [vmem:[%s3 + $0x40] sm:$0xff]
        %v655 = vld [vmem:[%s3 + $0x48] sm:$0xff]
        %v656 = vld [vmem:[%s3 + $0x50] sm:$0xff]
        %v657 = vld [vmem:[%s3 + $0x58] sm:$0xff]
        %v658 = vld [vmem:[%s3 + $0x60] sm:$0xff]
        %v659 = vld [vmem:[%s3 + $0x68] sm:$0xff]
        %v660 = vld [vmem:[%s3 + $0x70] sm:$0xff]
        %v661 = vld [vmem:[%s3 + $0x78] sm:$0xff]
        %v662 = vld [vmem:[#allocation2 + $0x1] sm:$0xff]
        %v663 = vld [vmem:[#allocation2 + $0x9] sm:$0xff]
        %v664 = vld [vmem:[#allocation2 + $0x11] sm:$0xff]
        %v665 = vld [vmem:[#allocation2 + $0x19] sm:$0xff]
        %s666 = scalar_lea.vmem %s3, 128
        %v667 = vld [vmem:[%s666] sm:$0xff]
        %v668 = vld [vmem:[%s666 + $0x8] sm:$0xff]
        %v669 = vld [vmem:[%s666 + $0x10] sm:$0xff]
        %v670 = vld [vmem:[%s666 + $0x18] sm:$0xff]
        %v671 = vld [vmem:[%s666 + $0x20] sm:$0xff]
        %v672 = vld [vmem:[%s666 + $0x28] sm:$0xff]
        %v673 = vld [vmem:[%s666 + $0x30] sm:$0xff]
        %v674 = vld [vmem:[%s666 + $0x38] sm:$0xff]
        %v675 = vld [vmem:[%s666 + $0x40] sm:$0xff]
        %v676 = vld [vmem:[%s666 + $0x48] sm:$0xff]
        %v677 = vld [vmem:[%s666 + $0x50] sm:$0xff]
        %v678 = vld [vmem:[%s666 + $0x58] sm:$0xff]
        %v679 = vld [vmem:[%s666 + $0x60] sm:$0xff]
        %v680 = vld [vmem:[%s666 + $0x68] sm:$0xff]
        %v681 = vld [vmem:[%s666 + $0x70] sm:$0xff]
        %v682 = vld [vmem:[%s666 + $0x78] sm:$0xff]
        %683 = vmatprep.subr.mxu0 0.0
        %684 = vmatpush1.msra.mxu0 %v667
        %685 = vmatprep.subr.mxu0 0.0
        %686 = vmatpush1.msra.mxu0 %v668
        %687 = vmatprep.subr.mxu0 0.0
        %688 = vmatpush1.msra.mxu0 %v669
        %689 = vmatprep.subr.mxu0 0.0
        %690 = vmatpush1.msra.mxu0 %v670
        %691 = vmatprep.subr.mxu0 0.0
        %692 = vmatpush1.msra.mxu0 %v671
        %693 = vmatprep.subr.mxu0 0.0
        %694 = vmatpush1.msra.mxu0 %v672
        %695 = vmatprep.subr.mxu0 0.0
        %696 = vmatpush1.msra.mxu0 %v673
        %697 = vmatprep.subr.mxu0 0.0
        %698 = vmatpush1.msra.mxu0 %v674
        %699 = vmatprep.subr.mxu0 0.0
        %700 = vmatpush1.msra.mxu0 %v675
        %701 = vmatprep.subr.mxu0 0.0
        %702 = vmatpush1.msra.mxu0 %v676
        %703 = vmatprep.subr.mxu0 0.0
        %704 = vmatpush1.msra.mxu0 %v677
        %705 = vmatprep.subr.mxu0 0.0
        %706 = vmatpush1.msra.mxu0 %v678
        %707 = vmatprep.subr.mxu0 0.0
        %708 = vmatpush1.msra.mxu0 %v679
        %709 = vmatprep.subr.mxu0 0.0
        %710 = vmatpush1.msra.mxu0 %v680
        %711 = vmatprep.subr.mxu0 0.0
        %712 = vmatpush1.msra.mxu0 %v681
        %713 = vmatprep.subr.mxu0 0.0
        %714 = vmatpush1.msra.mxu0 %v682
        %715 = vmatprep.subr.mxu0 0.0
        %716 = vmatpush1.msra.mxu0 0.0
        %717 = vmatprep.subr.mxu0 0.0
        %718 = vmatpush1.msra.mxu0 0.0
        %719 = vmatprep.subr.mxu0 0.0
        %720 = vmatpush1.msra.mxu0 0.0
        %721 = vmatprep.subr.mxu0 0.0
        %722 = vmatpush1.msra.mxu0 0.0
        %723 = vmatprep.subr.mxu0 0.0
        %724 = vmatpush1.msra.mxu0 0.0
        %725 = vmatprep.subr.mxu0 0.0
        %726 = vmatpush1.msra.mxu0 0.0
        %727 = vmatprep.subr.mxu0 0.0
        %728 = vmatpush1.msra.mxu0 0.0
        %729 = vmatprep.subr.mxu0 0.0
        %730 = vmatpush1.msra.mxu0 0.0
        %731 = vmatprep.subr.mxu0 0.0
        %732 = vmatpush1.msra.mxu0 0.0
        %733 = vmatprep.subr.mxu0 0.0
        %734 = vmatpush1.msra.mxu0 0.0
        %735 = vmatprep.subr.mxu0 0.0
        %736 = vmatpush1.msra.mxu0 0.0
        %737 = vmatprep.subr.mxu0 0.0
        %738 = vmatpush1.msra.mxu0 0.0
        %739 = vmatprep.subr.mxu0 0.0
        %740 = vmatpush1.msra.mxu0 0.0
        %741 = vmatprep.subr.mxu0 0.0
        %742 = vmatpush1.msra.mxu0 0.0
        %743 = vmatprep.subr.mxu0 0.0
        %744 = vmatpush1.msra.mxu0 0.0
        %745 = vmatprep.subr.mxu0 0.0
        %746 = vmatpush1.msra.mxu0 0.0
        %747 = vmatprep.mubr.f32.mxu0 0.0
        %748 = vmatmul.mubr.f32.gmra.mrb[0].mxu0 %v662
        %v749 = vpop.f32.mrb[0].mxu0
        %v750 = vadd.f32 0.0, %v749
        %v751 = vpop.f32.mrb[0].mxu0
        %752 = vmatprep.mubr.f32.mxu0 0.0
        %753 = vmatmul.mubr.f32.gmra.mrb[0].mxu0 %v663
        %v754 = vpop.f32.mrb[0].mxu0
        %v755 = vadd.f32 0.0, %v754
        %v756 = vpop.f32.mrb[0].mxu0
        %757 = vmatprep.mubr.f32.mxu0 0.0
        %758 = vmatmul.mubr.f32.gmra.mrb[0].mxu0 %v664
        %v759 = vpop.f32.mrb[0].mxu0
        %v760 = vadd.f32 0.0, %v759
        %v761 = vpop.f32.mrb[0].mxu0
        %762 = vmatprep.mubr.f32.mxu0 0.0
        %763 = vmatmul.mubr.f32.gmra.mrb[0].mxu0 %v665
        %v764 = vpop.f32.mrb[0].mxu0
        %v765 = vadd.f32 0.0, %v764
        %v766 = vpop.f32.mrb[0].mxu0
        %767 = vdwg.mxu0
        %768 = vmatprep.subr.mxu0 0.0
        %769 = vmatpush1.msra.mxu0 %v646
        %770 = vmatprep.subr.mxu0 0.0
        %771 = vmatpush1.msra.mxu0 %v647
        %772 = vmatprep.subr.mxu0 0.0
        %773 = vmatpush1.msra.mxu0 %v648
        %774 = vmatprep.subr.mxu0 0.0
        %775 = vmatpush1.msra.mxu0 %v649
        %776 = vmatprep.subr.mxu0 0.0
        %777 = vmatpush1.msra.mxu0 %v650
        %778 = vmatprep.subr.mxu0 0.0
        %779 = vmatpush1.msra.mxu0 %v651
        %780 = vmatprep.subr.mxu0 0.0
        %781 = vmatpush1.msra.mxu0 %v652
        %782 = vmatprep.subr.mxu0 0.0
        %783 = vmatpush1.msra.mxu0 %v653
        %784 = vmatprep.subr.mxu0 0.0
        %785 = vmatpush1.msra.mxu0 %v654
        %786 = vmatprep.subr.mxu0 0.0
        %787 = vmatpush1.msra.mxu0 %v655
        %788 = vmatprep.subr.mxu0 0.0
        %789 = vmatpush1.msra.mxu0 %v656
        %790 = vmatprep.subr.mxu0 0.0
        %791 = vmatpush1.msra.mxu0 %v657
        %792 = vmatprep.subr.mxu0 0.0
        %793 = vmatpush1.msra.mxu0 %v658
        %794 = vmatprep.subr.mxu0 0.0
        %795 = vmatpush1.msra.mxu0 %v659
        %796 = vmatprep.subr.mxu0 0.0
        %797 = vmatpush1.msra.mxu0 %v660
        %798 = vmatprep.subr.mxu0 0.0
        %799 = vmatpush1.msra.mxu0 %v661
        %800 = vmatprep.subr.mxu0 0.0
        %801 = vmatpush1.msra.mxu0 0.0
        %802 = vmatprep.subr.mxu0 0.0
        %803 = vmatpush1.msra.mxu0 0.0
        %804 = vmatprep.subr.mxu0 0.0
        %805 = vmatpush1.msra.mxu0 0.0
        %806 = vmatprep.subr.mxu0 0.0
        %807 = vmatpush1.msra.mxu0 0.0
        %808 = vmatprep.subr.mxu0 0.0
        %809 = vmatpush1.msra.mxu0 0.0
        %810 = vmatprep.subr.mxu0 0.0
        %811 = vmatpush1.msra.mxu0 0.0
        %812 = vmatprep.subr.mxu0 0.0
        %813 = vmatpush1.msra.mxu0 0.0
        %814 = vmatprep.subr.mxu0 0.0
        %815 = vmatpush1.msra.mxu0 0.0
        %816 = vmatprep.subr.mxu0 0.0
        %817 = vmatpush1.msra.mxu0 0.0
        %818 = vmatprep.subr.mxu0 0.0
        %819 = vmatpush1.msra.mxu0 0.0
        %820 = vmatprep.subr.mxu0 0.0
        %821 = vmatpush1.msra.mxu0 0.0
        %822 = vmatprep.subr.mxu0 0.0
        %823 = vmatpush1.msra.mxu0 0.0
        %824 = vmatprep.subr.mxu0 0.0
        %825 = vmatpush1.msra.mxu0 0.0
        %826 = vmatprep.subr.mxu0 0.0
        %827 = vmatpush1.msra.mxu0 0.0
        %828 = vmatprep.subr.mxu0 0.0
        %829 = vmatpush1.msra.mxu0 0.0
        %830 = vmatprep.subr.mxu0 0.0
        %831 = vmatpush1.msra.mxu0 0.0
        %832 = vmatprep.mubr.f32.mxu0 0.0
        %833 = vmatmul.mubr.f32.gmra.mrb[0].mxu0 %v642
        %v834 = vpop.f32.mrb[0].mxu0
        %v835 = vadd.f32 %v750, %v834
        %v836 = vpop.f32.mrb[0].mxu0
        %837 = vmatprep.mubr.f32.mxu0 0.0
        %838 = vmatmul.mubr.f32.gmra.mrb[0].mxu0 %v643
        %v839 = vpop.f32.mrb[0].mxu0
        %v840 = vadd.f32 %v755, %v839
        %v841 = vpop.f32.mrb[0].mxu0
        %842 = vmatprep.mubr.f32.mxu0 0.0
        %843 = vmatmul.mubr.f32.gmra.mrb[0].mxu0 %v644
        %v844 = vpop.f32.mrb[0].mxu0
        %v845 = vadd.f32 %v760, %v844
        %v846 = vpop.f32.mrb[0].mxu0
        %847 = vmatprep.mubr.f32.mxu0 0.0
        %848 = vmatmul.mubr.f32.gmra.mrb[0].mxu0 %v645
        %v849 = vpop.f32.mrb[0].mxu0
        %v850 = vadd.f32 %v765, %v849
        %v851 = vpop.f32.mrb[0].mxu0
        %852 = vdwg.mxu0
        %v853 = vld [vmem:[#allocation2 + $0x2] sm:$0xff]
        %v854 = vld [vmem:[#allocation2 + $0xa] sm:$0xff]
        %v855 = vld [vmem:[#allocation2 + $0x12] sm:$0xff]
        %v856 = vld [vmem:[#allocation2 + $0x1a] sm:$0xff]
        %s857 = scalar_lea.vmem %s3, 256
        %v858 = vld [vmem:[%s857] sm:$0xff]
        %v859 = vld [vmem:[%s857 + $0x8] sm:$0xff]
        %v860 = vld [vmem:[%s857 + $0x10] sm:$0xff]
        %v861 = vld [vmem:[%s857 + $0x18] sm:$0xff]
        %v862 = vld [vmem:[%s857 + $0x20] sm:$0xff]
        %v863 = vld [vmem:[%s857 + $0x28] sm:$0xff]
        %v864 = vld [vmem:[%s857 + $0x30] sm:$0xff]
        %v865 = vld [vmem:[%s857 + $0x38] sm:$0xff]
        %v866 = vld [vmem:[%s857 + $0x40] sm:$0xff]
        %v867 = vld [vmem:[%s857 + $0x48] sm:$0xff]
        %v868 = vld [vmem:[%s857 + $0x50] sm:$0xff]
        %v869 = vld [vmem:[%s857 + $0x58] sm:$0xff]
        %v870 = vld [vmem:[%s857 + $0x60] sm:$0xff]
        %v871 = vld [vmem:[%s857 + $0x68] sm:$0xff]
        %v872 = vld [vmem:[%s857 + $0x70] sm:$0xff]
        %v873 = vld [vmem:[%s857 + $0x78] sm:$0xff]
        %874 = vmatprep.subr.mxu0 0.0
        %875 = vmatpush1.msra.mxu0 %v858
        %876 = vmatprep.subr.mxu0 0.0
        %877 = vmatpush1.msra.mxu0 %v859
        %878 = vmatprep.subr.mxu0 0.0
        %879 = vmatpush1.msra.mxu0 %v860
        %880 = vmatprep.subr.mxu0 0.0
        %881 = vmatpush1.msra.mxu0 %v861
        %882 = vmatprep.subr.mxu0 0.0
        %883 = vmatpush1.msra.mxu0 %v862
        %884 = vmatprep.subr.mxu0 0.0
        %885 = vmatpush1.msra.mxu0 %v863
        %886 = vmatprep.subr.mxu0 0.0
        %887 = vmatpush1.msra.mxu0 %v864
        %888 = vmatprep.subr.mxu0 0.0
        %889 = vmatpush1.msra.mxu0 %v865
        %890 = vmatprep.subr.mxu0 0.0
        %891 = vmatpush1.msra.mxu0 %v866
        %892 = vmatprep.subr.mxu0 0.0
        %893 = vmatpush1.msra.mxu0 %v867
        %894 = vmatprep.subr.mxu0 0.0
        %895 = vmatpush1.msra.mxu0 %v868
        %896 = vmatprep.subr.mxu0 0.0
        %897 = vmatpush1.msra.mxu0 %v869
        %898 = vmatprep.subr.mxu0 0.0
        %899 = vmatpush1.msra.mxu0 %v870
        %900 = vmatprep.subr.mxu0 0.0
        %901 = vmatpush1.msra.mxu0 %v871
        %902 = vmatprep.subr.mxu0 0.0
        %903 = vmatpush1.msra.mxu0 %v872
        %904 = vmatprep.subr.mxu0 0.0
        %905 = vmatpush1.msra.mxu0 %v873
        %906 = vmatprep.subr.mxu0 0.0
        %907 = vmatpush1.msra.mxu0 0.0
        %908 = vmatprep.subr.mxu0 0.0
        %909 = vmatpush1.msra.mxu0 0.0
        %910 = vmatprep.subr.mxu0 0.0
        %911 = vmatpush1.msra.mxu0 0.0
        %912 = vmatprep.subr.mxu0 0.0
        %913 = vmatpush1.msra.mxu0 0.0
        %914 = vmatprep.subr.mxu0 0.0
        %915 = vmatpush1.msra.mxu0 0.0
        %916 = vmatprep.subr.mxu0 0.0
        %917 = vmatpush1.msra.mxu0 0.0
        %918 = vmatprep.subr.mxu0 0.0
        %919 = vmatpush1.msra.mxu0 0.0
        %920 = vmatprep.subr.mxu0 0.0
        %921 = vmatpush1.msra.mxu0 0.0
        %922 = vmatprep.subr.mxu0 0.0
        %923 = vmatpush1.msra.mxu0 0.0
        %924 = vmatprep.subr.mxu0 0.0
        %925 = vmatpush1.msra.mxu0 0.0
        %926 = vmatprep.subr.mxu0 0.0
        %927 = vmatpush1.msra.mxu0 0.0
        %928 = vmatprep.subr.mxu0 0.0
        %929 = vmatpush1.msra.mxu0 0.0
        %930 = vmatprep.subr.mxu0 0.0
        %931 = vmatpush1.msra.mxu0 0.0
        %932 = vmatprep.subr.mxu0 0.0
        %933 = vmatpush1.msra.mxu0 0.0
        %934 = vmatprep.subr.mxu0 0.0
        %935 = vmatpush1.msra.mxu0 0.0
        %936 = vmatprep.subr.mxu0 0.0
        %937 = vmatpush1.msra.mxu0 0.0
        %938 = vmatprep.mubr.f32.mxu0 0.0
        %939 = vmatmul.mubr.f32.gmra.mrb[0].mxu0 %v853
        %v940 = vpop.f32.mrb[0].mxu0
        %v941 = vadd.f32 0.0, %v940
        %v942 = vpop.f32.mrb[0].mxu0
        %943 = vmatprep.mubr.f32.mxu0 0.0
        %944 = vmatmul.mubr.f32.gmra.mrb[0].mxu0 %v854
        %v945 = vpop.f32.mrb[0].mxu0
        %v946 = vadd.f32 0.0, %v945
        %v947 = vpop.f32.mrb[0].mxu0
        %948 = vmatprep.mubr.f32.mxu0 0.0
        %949 = vmatmul.mubr.f32.gmra.mrb[0].mxu0 %v855
        %v950 = vpop.f32.mrb[0].mxu0
        %v951 = vadd.f32 0.0, %v950
        %v952 = vpop.f32.mrb[0].mxu0
        %953 = vmatprep.mubr.f32.mxu0 0.0
        %954 = vmatmul.mubr.f32.gmra.mrb[0].mxu0 %v856
        %v955 = vpop.f32.mrb[0].mxu0
        %v956 = vadd.f32 0.0, %v955
        %v957 = vpop.f32.mrb[0].mxu0
        %958 = vdwg.mxu0
        %v959 = vadd.f32 %v835, %v941
        %v960 = vadd.f32 %v840, %v946
        %v961 = vadd.f32 %v845, %v951
        %v962 = vadd.f32 %v850, %v956
        %v963 = vld [vmem:[#allocation2 + $0x7] sm:$0xff]
        %v964 = vld [vmem:[#allocation2 + $0xf] sm:$0xff]
        %v965 = vld [vmem:[#allocation2 + $0x17] sm:$0xff]
        %v966 = vld [vmem:[#allocation2 + $0x1f] sm:$0xff]
        %s967 = scalar_lea.vmem %s3, 384
        %v968 = vld [vmem:[%s967] sm:$0xff]
        %v969 = vld [vmem:[%s967 + $0x8] sm:$0xff]
        %v970 = vld [vmem:[%s967 + $0x10] sm:$0xff]
        %v971 = vld [vmem:[%s967 + $0x18] sm:$0xff]
        %v972 = vld [vmem:[%s967 + $0x20] sm:$0xff]
        %v973 = vld [vmem:[%s967 + $0x28] sm:$0xff]
        %v974 = vld [vmem:[%s967 + $0x30] sm:$0xff]
        %v975 = vld [vmem:[%s967 + $0x38] sm:$0xff]
        %v976 = vld [vmem:[%s967 + $0x40] sm:$0xff]
        %v977 = vld [vmem:[%s967 + $0x48] sm:$0xff]
        %v978 = vld [vmem:[%s967 + $0x50] sm:$0xff]
        %v979 = vld [vmem:[%s967 + $0x58] sm:$0xff]
        %v980 = vld [vmem:[%s967 + $0x60] sm:$0xff]
        %v981 = vld [vmem:[%s967 + $0x68] sm:$0xff]
        %v982 = vld [vmem:[%s967 + $0x70] sm:$0xff]
        %v983 = vld [vmem:[%s967 + $0x78] sm:$0xff]
        %984 = vmatprep.subr.mxu0 0.0
        %985 = vmatpush1.msra.mxu0 %v968
        %986 = vmatprep.subr.mxu0 0.0
        %987 = vmatpush1.msra.mxu0 %v969
        %988 = vmatprep.subr.mxu0 0.0
        %989 = vmatpush1.msra.mxu0 %v970
        %990 = vmatprep.subr.mxu0 0.0
        %991 = vmatpush1.msra.mxu0 %v971
        %992 = vmatprep.subr.mxu0 0.0
        %993 = vmatpush1.msra.mxu0 %v972
        %994 = vmatprep.subr.mxu0 0.0
        %995 = vmatpush1.msra.mxu0 %v973
        %996 = vmatprep.subr.mxu0 0.0
        %997 = vmatpush1.msra.mxu0 %v974
        %998 = vmatprep.subr.mxu0 0.0
        %999 = vmatpush1.msra.mxu0 %v975
        %1000 = vmatprep.subr.mxu0 0.0
        %1001 = vmatpush1.msra.mxu0 %v976
        %1002 = vmatprep.subr.mxu0 0.0
        %1003 = vmatpush1.msra.mxu0 %v977
        %1004 = vmatprep.subr.mxu0 0.0
        %1005 = vmatpush1.msra.mxu0 %v978
        %1006 = vmatprep.subr.mxu0 0.0
        %1007 = vmatpush1.msra.mxu0 %v979
        %1008 = vmatprep.subr.mxu0 0.0
        %1009 = vmatpush1.msra.mxu0 %v980
        %1010 = vmatprep.subr.mxu0 0.0
        %1011 = vmatpush1.msra.mxu0 %v981
        %1012 = vmatprep.subr.mxu0 0.0
        %1013 = vmatpush1.msra.mxu0 %v982
        %1014 = vmatprep.subr.mxu0 0.0
        %1015 = vmatpush1.msra.mxu0 %v983
        %1016 = vmatprep.subr.mxu0 0.0
        %1017 = vmatpush1.msra.mxu0 0.0
        %1018 = vmatprep.subr.mxu0 0.0
        %1019 = vmatpush1.msra.mxu0 0.0
        %1020 = vmatprep.subr.mxu0 0.0
        %1021 = vmatpush1.msra.mxu0 0.0
        %1022 = vmatprep.subr.mxu0 0.0
        %1023 = vmatpush1.msra.mxu0 0.0
        %1024 = vmatprep.subr.mxu0 0.0
        %1025 = vmatpush1.msra.mxu0 0.0
        %1026 = vmatprep.subr.mxu0 0.0
        %1027 = vmatpush1.msra.mxu0 0.0
        %1028 = vmatprep.subr.mxu0 0.0
        %1029 = vmatpush1.msra.mxu0 0.0
        %1030 = vmatprep.subr.mxu0 0.0
        %1031 = vmatpush1.msra.mxu0 0.0
        %1032 = vmatprep.subr.mxu0 0.0
        %1033 = vmatpush1.msra.mxu0 0.0
        %1034 = vmatprep.subr.mxu0 0.0
        %1035 = vmatpush1.msra.mxu0 0.0
        %1036 = vmatprep.subr.mxu0 0.0
        %1037 = vmatpush1.msra.mxu0 0.0
        %1038 = vmatprep.subr.mxu0 0.0
        %1039 = vmatpush1.msra.mxu0 0.0
        %1040 = vmatprep.subr.mxu0 0.0
        %1041 = vmatpush1.msra.mxu0 0.0
        %1042 = vmatprep.subr.mxu0 0.0
        %1043 = vmatpush1.msra.mxu0 0.0
        %1044 = vmatprep.subr.mxu0 0.0
        %1045 = vmatpush1.msra.mxu0 0.0
        %1046 = vmatprep.subr.mxu0 0.0
        %1047 = vmatpush1.msra.mxu0 0.0
        %1048 = vmatprep.mubr.f32.mxu0 0.0
        %1049 = vmatmul.mubr.f32.gmra.mrb[0].mxu0 %v963
        %v1050 = vpop.f32.mrb[0].mxu0
        %v1051 = vadd.f32 0.0, %v1050
        %v1052 = vpop.f32.mrb[0].mxu0
        %1053 = vmatprep.mubr.f32.mxu0 0.0
        %1054 = vmatmul.mubr.f32.gmra.mrb[0].mxu0 %v964
        %v1055 = vpop.f32.mrb[0].mxu0
        %v1056 = vadd.f32 0.0, %v1055
        %v1057 = vpop.f32.mrb[0].mxu0
        %1058 = vmatprep.mubr.f32.mxu0 0.0
        %1059 = vmatmul.mubr.f32.gmra.mrb[0].mxu0 %v965
        %v1060 = vpop.f32.mrb[0].mxu0
        %v1061 = vadd.f32 0.0, %v1060
        %v1062 = vpop.f32.mrb[0].mxu0
        %1063 = vmatprep.mubr.f32.mxu0 0.0
        %1064 = vmatmul.mubr.f32.gmra.mrb[0].mxu0 %v966
        %v1065 = vpop.f32.mrb[0].mxu0
        %v1066 = vadd.f32 0.0, %v1065
        %v1067 = vpop.f32.mrb[0].mxu0
        %1068 = vdwg.mxu0
        %v1069 = vadd.f32 %v959, %v1051
        %v1070 = vadd.f32 %v960, %v1056
        %v1071 = vadd.f32 %v961, %v1061
        %v1072 = vadd.f32 %v962, %v1066
        %v1073 = vld [vmem:[#allocation2 + $0x8] sm:$0xff]
        %v1074 = vld [vmem:[#allocation2 + $0x10] sm:$0xff]
        %v1075 = vld [vmem:[#allocation2 + $0x18] sm:$0xff]
        %v1076 = vld [vmem:[#allocation2 + $0x20] sm:$0xff]
        %s1077 = scalar_lea.vmem %s3, 512
        %v1078 = vld [vmem:[%s1077] sm:$0xff]
        %v1079 = vld [vmem:[%s1077 + $0x8] sm:$0xff]
        %v1080 = vld [vmem:[%s1077 + $0x10] sm:$0xff]
        %v1081 = vld [vmem:[%s1077 + $0x18] sm:$0xff]
        %v1082 = vld [vmem:[%s1077 + $0x20] sm:$0xff]
        %v1083 = vld [vmem:[%s1077 + $0x28] sm:$0xff]
        %v1084 = vld [vmem:[%s1077 + $0x30] sm:$0xff]
        %v1085 = vld [vmem:[%s1077 + $0x38] sm:$0xff]
        %v1086 = vld [vmem:[%s1077 + $0x40] sm:$0xff]
        %v1087 = vld [vmem:[%s1077 + $0x48] sm:$0xff]
        %v1088 = vld [vmem:[%s1077 + $0x50] sm:$0xff]
        %v1089 = vld [vmem:[%s1077 + $0x58] sm:$0xff]
        %v1090 = vld [vmem:[%s1077 + $0x60] sm:$0xff]
        %v1091 = vld [vmem:[%s1077 + $0x68] sm:$0xff]
        %v1092 = vld [vmem:[%s1077 + $0x70] sm:$0xff]
        %v1093 = vld [vmem:[%s1077 + $0x78] sm:$0xff]
        %1094 = vmatprep.subr.mxu0 0.0
        %1095 = vmatpush1.msra.mxu0 %v1078
        %1096 = vmatprep.subr.mxu0 0.0
        %1097 = vmatpush1.msra.mxu0 %v1079
        %1098 = vmatprep.subr.mxu0 0.0
        %1099 = vmatpush1.msra.mxu0 %v1080
        %1100 = vmatprep.subr.mxu0 0.0
        %1101 = vmatpush1.msra.mxu0 %v1081
        %1102 = vmatprep.subr.mxu0 0.0
        %1103 = vmatpush1.msra.mxu0 %v1082
        %1104 = vmatprep.subr.mxu0 0.0
        %1105 = vmatpush1.msra.mxu0 %v1083
        %1106 = vmatprep.subr.mxu0 0.0
        %1107 = vmatpush1.msra.mxu0 %v1084
        %1108 = vmatprep.subr.mxu0 0.0
        %1109 = vmatpush1.msra.mxu0 %v1085
        %1110 = vmatprep.subr.mxu0 0.0
        %1111 = vmatpush1.msra.mxu0 %v1086
        %1112 = vmatprep.subr.mxu0 0.0
        %1113 = vmatpush1.msra.mxu0 %v1087
        %1114 = vmatprep.subr.mxu0 0.0
        %1115 = vmatpush1.msra.mxu0 %v1088
        %1116 = vmatprep.subr.mxu0 0.0
        %1117 = vmatpush1.msra.mxu0 %v1089
        %1118 = vmatprep.subr.mxu0 0.0
        %1119 = vmatpush1.msra.mxu0 %v1090
        %1120 = vmatprep.subr.mxu0 0.0
        %1121 = vmatpush1.msra.mxu0 %v1091
        %1122 = vmatprep.subr.mxu0 0.0
        %1123 = vmatpush1.msra.mxu0 %v1092
        %1124 = vmatprep.subr.mxu0 0.0
        %1125 = vmatpush1.msra.mxu0 %v1093
        %1126 = vmatprep.subr.mxu0 0.0
        %1127 = vmatpush1.msra.mxu0 0.0
        %1128 = vmatprep.subr.mxu0 0.0
        %1129 = vmatpush1.msra.mxu0 0.0
        %1130 = vmatprep.subr.mxu0 0.0
        %1131 = vmatpush1.msra.mxu0 0.0
        %1132 = vmatprep.subr.mxu0 0.0
        %1133 = vmatpush1.msra.mxu0 0.0
        %1134 = vmatprep.subr.mxu0 0.0
        %1135 = vmatpush1.msra.mxu0 0.0
        %1136 = vmatprep.subr.mxu0 0.0
        %1137 = vmatpush1.msra.mxu0 0.0
        %1138 = vmatprep.subr.mxu0 0.0
        %1139 = vmatpush1.msra.mxu0 0.0
        %1140 = vmatprep.subr.mxu0 0.0
        %1141 = vmatpush1.msra.mxu0 0.0
        %1142 = vmatprep.subr.mxu0 0.0
        %1143 = vmatpush1.msra.mxu0 0.0
        %1144 = vmatprep.subr.mxu0 0.0
        %1145 = vmatpush1.msra.mxu0 0.0
        %1146 = vmatprep.subr.mxu0 0.0
        %1147 = vmatpush1.msra.mxu0 0.0
        %1148 = vmatprep.subr.mxu0 0.0
        %1149 = vmatpush1.msra.mxu0 0.0
        %1150 = vmatprep.subr.mxu0 0.0
        %1151 = vmatpush1.msra.mxu0 0.0
        %1152 = vmatprep.subr.mxu0 0.0
        %1153 = vmatpush1.msra.mxu0 0.0
        %1154 = vmatprep.subr.mxu0 0.0
        %1155 = vmatpush1.msra.mxu0 0.0
        %1156 = vmatprep.subr.mxu0 0.0
        %1157 = vmatpush1.msra.mxu0 0.0
        %1158 = vmatprep.mubr.f32.mxu0 0.0
        %1159 = vmatmul.mubr.f32.gmra.mrb[0].mxu0 %v1073
        %v1160 = vpop.f32.mrb[0].mxu0
        %v1161 = vadd.f32 0.0, %v1160
        %v1162 = vpop.f32.mrb[0].mxu0
        %1163 = vmatprep.mubr.f32.mxu0 0.0
        %1164 = vmatmul.mubr.f32.gmra.mrb[0].mxu0 %v1074
        %v1165 = vpop.f32.mrb[0].mxu0
        %v1166 = vadd.f32 0.0, %v1165
        %v1167 = vpop.f32.mrb[0].mxu0
        %1168 = vmatprep.mubr.f32.mxu0 0.0
        %1169 = vmatmul.mubr.f32.gmra.mrb[0].mxu0 %v1075
        %v1170 = vpop.f32.mrb[0].mxu0
        %v1171 = vadd.f32 0.0, %v1170
        %v1172 = vpop.f32.mrb[0].mxu0
        %1173 = vmatprep.mubr.f32.mxu0 0.0
        %1174 = vmatmul.mubr.f32.gmra.mrb[0].mxu0 %v1076
        %v1175 = vpop.f32.mrb[0].mxu0
        %v1176 = vadd.f32 0.0, %v1175
        %v1177 = vpop.f32.mrb[0].mxu0
        %1178 = vdwg.mxu0
        %v1179 = vadd.f32 %v1069, %v1161
        %v1180 = vadd.f32 %v1070, %v1166
        %v1181 = vadd.f32 %v1071, %v1171
        %v1182 = vadd.f32 %v1072, %v1176
        %v1183 = vld [vmem:[#allocation2 + $0x9] sm:$0xff]
        %v1184 = vld [vmem:[#allocation2 + $0x11] sm:$0xff]
        %v1185 = vld [vmem:[#allocation2 + $0x19] sm:$0xff]
        %v1186 = vld [vmem:[#allocation2 + $0x21] sm:$0xff]
        %s1187 = scalar_lea.vmem %s3, 640
        %v1188 = vld [vmem:[%s1187] sm:$0xff]
        %v1189 = vld [vmem:[%s1187 + $0x8] sm:$0xff]
        %v1190 = vld [vmem:[%s1187 + $0x10] sm:$0xff]
        %v1191 = vld [vmem:[%s1187 + $0x18] sm:$0xff]
        %v1192 = vld [vmem:[%s1187 + $0x20] sm:$0xff]
        %v1193 = vld [vmem:[%s1187 + $0x28] sm:$0xff]
        %v1194 = vld [vmem:[%s1187 + $0x30] sm:$0xff]
        %v1195 = vld [vmem:[%s1187 + $0x38] sm:$0xff]
        %v1196 = vld [vmem:[%s1187 + $0x40] sm:$0xff]
        %v1197 = vld [vmem:[%s1187 + $0x48] sm:$0xff]
        %v1198 = vld [vmem:[%s1187 + $0x50] sm:$0xff]
        %v1199 = vld [vmem:[%s1187 + $0x58] sm:$0xff]
        %v1200 = vld [vmem:[%s1187 + $0x60] sm:$0xff]
        %v1201 = vld [vmem:[%s1187 + $0x68] sm:$0xff]
        %v1202 = vld [vmem:[%s1187 + $0x70] sm:$0xff]
        %v1203 = vld [vmem:[%s1187 + $0x78] sm:$0xff]
        %1204 = vmatprep.subr.mxu0 0.0
        %1205 = vmatpush1.msra.mxu0 %v1188
        %1206 = vmatprep.subr.mxu0 0.0
        %1207 = vmatpush1.msra.mxu0 %v1189
        %1208 = vmatprep.subr.mxu0 0.0
        %1209 = vmatpush1.msra.mxu0 %v1190
        %1210 = vmatprep.subr.mxu0 0.0
        %1211 = vmatpush1.msra.mxu0 %v1191
        %1212 = vmatprep.subr.mxu0 0.0
        %1213 = vmatpush1.msra.mxu0 %v1192
        %1214 = vmatprep.subr.mxu0 0.0
        %1215 = vmatpush1.msra.mxu0 %v1193
        %1216 = vmatprep.subr.mxu0 0.0
        %1217 = vmatpush1.msra.mxu0 %v1194
        %1218 = vmatprep.subr.mxu0 0.0
        %1219 = vmatpush1.msra.mxu0 %v1195
        %1220 = vmatprep.subr.mxu0 0.0
        %1221 = vmatpush1.msra.mxu0 %v1196
        %1222 = vmatprep.subr.mxu0 0.0
        %1223 = vmatpush1.msra.mxu0 %v1197
        %1224 = vmatprep.subr.mxu0 0.0
        %1225 = vmatpush1.msra.mxu0 %v1198
        %1226 = vmatprep.subr.mxu0 0.0
        %1227 = vmatpush1.msra.mxu0 %v1199
        %1228 = vmatprep.subr.mxu0 0.0
        %1229 = vmatpush1.msra.mxu0 %v1200
        %1230 = vmatprep.subr.mxu0 0.0
        %1231 = vmatpush1.msra.mxu0 %v1201
        %1232 = vmatprep.subr.mxu0 0.0
        %1233 = vmatpush1.msra.mxu0 %v1202
        %1234 = vmatprep.subr.mxu0 0.0
        %1235 = vmatpush1.msra.mxu0 %v1203
        %1236 = vmatprep.subr.mxu0 0.0
        %1237 = vmatpush1.msra.mxu0 0.0
        %1238 = vmatprep.subr.mxu0 0.0
        %1239 = vmatpush1.msra.mxu0 0.0
        %1240 = vmatprep.subr.mxu0 0.0
        %1241 = vmatpush1.msra.mxu0 0.0
        %1242 = vmatprep.subr.mxu0 0.0
        %1243 = vmatpush1.msra.mxu0 0.0
        %1244 = vmatprep.subr.mxu0 0.0
        %1245 = vmatpush1.msra.mxu0 0.0
        %1246 = vmatprep.subr.mxu0 0.0
        %1247 = vmatpush1.msra.mxu0 0.0
        %1248 = vmatprep.subr.mxu0 0.0
        %1249 = vmatpush1.msra.mxu0 0.0
        %1250 = vmatprep.subr.mxu0 0.0
        %1251 = vmatpush1.msra.mxu0 0.0
        %1252 = vmatprep.subr.mxu0 0.0
        %1253 = vmatpush1.msra.mxu0 0.0
        %1254 = vmatprep.subr.mxu0 0.0
        %1255 = vmatpush1.msra.mxu0 0.0
        %1256 = vmatprep.subr.mxu0 0.0
        %1257 = vmatpush1.msra.mxu0 0.0
        %1258 = vmatprep.subr.mxu0 0.0
        %1259 = vmatpush1.msra.mxu0 0.0
        %1260 = vmatprep.subr.mxu0 0.0
        %1261 = vmatpush1.msra.mxu0 0.0
        %1262 = vmatprep.subr.mxu0 0.0
        %1263 = vmatpush1.msra.mxu0 0.0
        %1264 = vmatprep.subr.mxu0 0.0
        %1265 = vmatpush1.msra.mxu0 0.0
        %1266 = vmatprep.subr.mxu0 0.0
        %1267 = vmatpush1.msra.mxu0 0.0
        %1268 = vmatprep.mubr.f32.mxu0 0.0
        %1269 = vmatmul.mubr.f32.gmra.mrb[0].mxu0 %v1183
        %v1270 = vpop.f32.mrb[0].mxu0
        %v1271 = vadd.f32 0.0, %v1270
        %v1272 = vpop.f32.mrb[0].mxu0
        %1273 = vmatprep.mubr.f32.mxu0 0.0
        %1274 = vmatmul.mubr.f32.gmra.mrb[0].mxu0 %v1184
        %v1275 = vpop.f32.mrb[0].mxu0
        %v1276 = vadd.f32 0.0, %v1275
        %v1277 = vpop.f32.mrb[0].mxu0
        %1278 = vmatprep.mubr.f32.mxu0 0.0
        %1279 = vmatmul.mubr.f32.gmra.mrb[0].mxu0 %v1185
        %v1280 = vpop.f32.mrb[0].mxu0
        %v1281 = vadd.f32 0.0, %v1280
        %v1282 = vpop.f32.mrb[0].mxu0
        %1283 = vmatprep.mubr.f32.mxu0 0.0
        %1284 = vmatmul.mubr.f32.gmra.mrb[0].mxu0 %v1186
        %v1285 = vpop.f32.mrb[0].mxu0
        %v1286 = vadd.f32 0.0, %v1285
        %v1287 = vpop.f32.mrb[0].mxu0
        %1288 = vdwg.mxu0
        %v1289 = vadd.f32 %v1179, %v1271
        %v1290 = vadd.f32 %v1180, %v1276
        %v1291 = vadd.f32 %v1181, %v1281
        %v1292 = vadd.f32 %v1182, %v1286
        %v1293 = vld [vmem:[#allocation2 + $0xe] sm:$0xff]
        %v1294 = vld [vmem:[#allocation2 + $0x16] sm:$0xff]
        %v1295 = vld [vmem:[#allocation2 + $0x1e] sm:$0xff]
        %v1296 = vld [vmem:[#allocation2 + $0x26] sm:$0xff]
        %s1297 = scalar_lea.vmem %s3, 768
        %v1298 = vld [vmem:[%s1297] sm:$0xff]
        %v1299 = vld [vmem:[%s1297 + $0x8] sm:$0xff]
        %v1300 = vld [vmem:[%s1297 + $0x10] sm:$0xff]
        %v1301 = vld [vmem:[%s1297 + $0x18] sm:$0xff]
        %v1302 = vld [vmem:[%s1297 + $0x20] sm:$0xff]
        %v1303 = vld [vmem:[%s1297 + $0x28] sm:$0xff]
        %v1304 = vld [vmem:[%s1297 + $0x30] sm:$0xff]
        %v1305 = vld [vmem:[%s1297 + $0x38] sm:$0xff]
        %v1306 = vld [vmem:[%s1297 + $0x40] sm:$0xff]
        %v1307 = vld [vmem:[%s1297 + $0x48] sm:$0xff]
        %v1308 = vld [vmem:[%s1297 + $0x50] sm:$0xff]
        %v1309 = vld [vmem:[%s1297 + $0x58] sm:$0xff]
        %v1310 = vld [vmem:[%s1297 + $0x60] sm:$0xff]
        %v1311 = vld [vmem:[%s1297 + $0x68] sm:$0xff]
        %v1312 = vld [vmem:[%s1297 + $0x70] sm:$0xff]
        %v1313 = vld [vmem:[%s1297 + $0x78] sm:$0xff]
        %1314 = vmatprep.subr.mxu0 0.0
        %1315 = vmatpush1.msra.mxu0 %v1298
        %1316 = vmatprep.subr.mxu0 0.0
        %1317 = vmatpush1.msra.mxu0 %v1299
        %1318 = vmatprep.subr.mxu0 0.0
        %1319 = vmatpush1.msra.mxu0 %v1300
        %1320 = vmatprep.subr.mxu0 0.0
        %1321 = vmatpush1.msra.mxu0 %v1301
        %1322 = vmatprep.subr.mxu0 0.0
        %1323 = vmatpush1.msra.mxu0 %v1302
        %1324 = vmatprep.subr.mxu0 0.0
        %1325 = vmatpush1.msra.mxu0 %v1303
        %1326 = vmatprep.subr.mxu0 0.0
        %1327 = vmatpush1.msra.mxu0 %v1304
        %1328 = vmatprep.subr.mxu0 0.0
        %1329 = vmatpush1.msra.mxu0 %v1305
        %1330 = vmatprep.subr.mxu0 0.0
        %1331 = vmatpush1.msra.mxu0 %v1306
        %1332 = vmatprep.subr.mxu0 0.0
        %1333 = vmatpush1.msra.mxu0 %v1307
        %1334 = vmatprep.subr.mxu0 0.0
        %1335 = vmatpush1.msra.mxu0 %v1308
        %1336 = vmatprep.subr.mxu0 0.0
        %1337 = vmatpush1.msra.mxu0 %v1309
        %1338 = vmatprep.subr.mxu0 0.0
        %1339 = vmatpush1.msra.mxu0 %v1310
        %1340 = vmatprep.subr.mxu0 0.0
        %1341 = vmatpush1.msra.mxu0 %v1311
        %1342 = vmatprep.subr.mxu0 0.0
        %1343 = vmatpush1.msra.mxu0 %v1312
        %1344 = vmatprep.subr.mxu0 0.0
        %1345 = vmatpush1.msra.mxu0 %v1313
        %1346 = vmatprep.subr.mxu0 0.0
        %1347 = vmatpush1.msra.mxu0 0.0
        %1348 = vmatprep.subr.mxu0 0.0
        %1349 = vmatpush1.msra.mxu0 0.0
        %1350 = vmatprep.subr.mxu0 0.0
        %1351 = vmatpush1.msra.mxu0 0.0
        %1352 = vmatprep.subr.mxu0 0.0
        %1353 = vmatpush1.msra.mxu0 0.0
        %1354 = vmatprep.subr.mxu0 0.0
        %1355 = vmatpush1.msra.mxu0 0.0
        %1356 = vmatprep.subr.mxu0 0.0
        %1357 = vmatpush1.msra.mxu0 0.0
        %1358 = vmatprep.subr.mxu0 0.0
        %1359 = vmatpush1.msra.mxu0 0.0
        %1360 = vmatprep.subr.mxu0 0.0
        %1361 = vmatpush1.msra.mxu0 0.0
        %1362 = vmatprep.subr.mxu0 0.0
        %1363 = vmatpush1.msra.mxu0 0.0
        %1364 = vmatprep.subr.mxu0 0.0
        %1365 = vmatpush1.msra.mxu0 0.0
        %1366 = vmatprep.subr.mxu0 0.0
        %1367 = vmatpush1.msra.mxu0 0.0
        %1368 = vmatprep.subr.mxu0 0.0
        %1369 = vmatpush1.msra.mxu0 0.0
        %1370 = vmatprep.subr.mxu0 0.0
        %1371 = vmatpush1.msra.mxu0 0.0
        %1372 = vmatprep.subr.mxu0 0.0
        %1373 = vmatpush1.msra.mxu0 0.0
        %1374 = vmatprep.subr.mxu0 0.0
        %1375 = vmatpush1.msra.mxu0 0.0
        %1376 = vmatprep.subr.mxu0 0.0
        %1377 = vmatpush1.msra.mxu0 0.0
        %1378 = vmatprep.mubr.f32.mxu0 0.0
        %1379 = vmatmul.mubr.f32.gmra.mrb[0].mxu0 %v1293
        %v1380 = vpop.f32.mrb[0].mxu0
        %v1381 = vadd.f32 0.0, %v1380
        %v1382 = vpop.f32.mrb[0].mxu0
        %1383 = vmatprep.mubr.f32.mxu0 0.0
        %1384 = vmatmul.mubr.f32.gmra.mrb[0].mxu0 %v1294
        %v1385 = vpop.f32.mrb[0].mxu0
        %v1386 = vadd.f32 0.0, %v1385
        %v1387 = vpop.f32.mrb[0].mxu0
        %1388 = vmatprep.mubr.f32.mxu0 0.0
        %1389 = vmatmul.mubr.f32.gmra.mrb[0].mxu0 %v1295
        %v1390 = vpop.f32.mrb[0].mxu0
        %v1391 = vadd.f32 0.0, %v1390
        %v1392 = vpop.f32.mrb[0].mxu0
        %1393 = vmatprep.mubr.f32.mxu0 0.0
        %1394 = vmatmul.mubr.f32.gmra.mrb[0].mxu0 %v1296
        %v1395 = vpop.f32.mrb[0].mxu0
        %v1396 = vadd.f32 0.0, %v1395
        %v1397 = vpop.f32.mrb[0].mxu0
        %1398 = vdwg.mxu0
        %v1399 = vadd.f32 %v1289, %v1381
        %v1400 = vadd.f32 %v1290, %v1386
        %v1401 = vadd.f32 %v1291, %v1391
        %v1402 = vadd.f32 %v1292, %v1396
        %v1403 = vld [vmem:[#allocation2 + $0xf] sm:$0xff]
        %v1404 = vld [vmem:[#allocation2 + $0x17] sm:$0xff]
        %v1405 = vld [vmem:[#allocation2 + $0x1f] sm:$0xff]
        %v1406 = vld [vmem:[#allocation2 + $0x27] sm:$0xff]
        %s1407 = scalar_lea.vmem %s3, 896
        %v1408 = vld [vmem:[%s1407] sm:$0xff]
        %v1409 = vld [vmem:[%s1407 + $0x8] sm:$0xff]
        %v1410 = vld [vmem:[%s1407 + $0x10] sm:$0xff]
        %v1411 = vld [vmem:[%s1407 + $0x18] sm:$0xff]
        %v1412 = vld [vmem:[%s1407 + $0x20] sm:$0xff]
        %v1413 = vld [vmem:[%s1407 + $0x28] sm:$0xff]
        %v1414 = vld [vmem:[%s1407 + $0x30] sm:$0xff]
        %v1415 = vld [vmem:[%s1407 + $0x38] sm:$0xff]
        %v1416 = vld [vmem:[%s1407 + $0x40] sm:$0xff]
        %v1417 = vld [vmem:[%s1407 + $0x48] sm:$0xff]
        %v1418 = vld [vmem:[%s1407 + $0x50] sm:$0xff]
        %v1419 = vld [vmem:[%s1407 + $0x58] sm:$0xff]
        %v1420 = vld [vmem:[%s1407 + $0x60] sm:$0xff]
        %v1421 = vld [vmem:[%s1407 + $0x68] sm:$0xff]
        %v1422 = vld [vmem:[%s1407 + $0x70] sm:$0xff]
        %v1423 = vld [vmem:[%s1407 + $0x78] sm:$0xff]
        %1424 = vmatprep.subr.mxu0 0.0
        %1425 = vmatpush1.msra.mxu0 %v1408
        %1426 = vmatprep.subr.mxu0 0.0
        %1427 = vmatpush1.msra.mxu0 %v1409
        %1428 = vmatprep.subr.mxu0 0.0
        %1429 = vmatpush1.msra.mxu0 %v1410
        %1430 = vmatprep.subr.mxu0 0.0
        %1431 = vmatpush1.msra.mxu0 %v1411
        %1432 = vmatprep.subr.mxu0 0.0
        %1433 = vmatpush1.msra.mxu0 %v1412
        %1434 = vmatprep.subr.mxu0 0.0
        %1435 = vmatpush1.msra.mxu0 %v1413
        %1436 = vmatprep.subr.mxu0 0.0
        %1437 = vmatpush1.msra.mxu0 %v1414
        %1438 = vmatprep.subr.mxu0 0.0
        %1439 = vmatpush1.msra.mxu0 %v1415
        %1440 = vmatprep.subr.mxu0 0.0
        %1441 = vmatpush1.msra.mxu0 %v1416
        %1442 = vmatprep.subr.mxu0 0.0
        %1443 = vmatpush1.msra.mxu0 %v1417
        %1444 = vmatprep.subr.mxu0 0.0
        %1445 = vmatpush1.msra.mxu0 %v1418
        %1446 = vmatprep.subr.mxu0 0.0
        %1447 = vmatpush1.msra.mxu0 %v1419
        %1448 = vmatprep.subr.mxu0 0.0
        %1449 = vmatpush1.msra.mxu0 %v1420
        %1450 = vmatprep.subr.mxu0 0.0
        %1451 = vmatpush1.msra.mxu0 %v1421
        %1452 = vmatprep.subr.mxu0 0.0
        %1453 = vmatpush1.msra.mxu0 %v1422
        %1454 = vmatprep.subr.mxu0 0.0
        %1455 = vmatpush1.msra.mxu0 %v1423
        %1456 = vmatprep.subr.mxu0 0.0
        %1457 = vmatpush1.msra.mxu0 0.0
        %1458 = vmatprep.subr.mxu0 0.0
        %1459 = vmatpush1.msra.mxu0 0.0
        %1460 = vmatprep.subr.mxu0 0.0
        %1461 = vmatpush1.msra.mxu0 0.0
        %1462 = vmatprep.subr.mxu0 0.0
        %1463 = vmatpush1.msra.mxu0 0.0
        %1464 = vmatprep.subr.mxu0 0.0
        %1465 = vmatpush1.msra.mxu0 0.0
        %1466 = vmatprep.subr.mxu0 0.0
        %1467 = vmatpush1.msra.mxu0 0.0
        %1468 = vmatprep.subr.mxu0 0.0
        %1469 = vmatpush1.msra.mxu0 0.0
        %1470 = vmatprep.subr.mxu0 0.0
        %1471 = vmatpush1.msra.mxu0 0.0
        %1472 = vmatprep.subr.mxu0 0.0
        %1473 = vmatpush1.msra.mxu0 0.0
        %1474 = vmatprep.subr.mxu0 0.0
        %1475 = vmatpush1.msra.mxu0 0.0
        %1476 = vmatprep.subr.mxu0 0.0
        %1477 = vmatpush1.msra.mxu0 0.0
        %1478 = vmatprep.subr.mxu0 0.0
        %1479 = vmatpush1.msra.mxu0 0.0
        %1480 = vmatprep.subr.mxu0 0.0
        %1481 = vmatpush1.msra.mxu0 0.0
        %1482 = vmatprep.subr.mxu0 0.0
        %1483 = vmatpush1.msra.mxu0 0.0
        %1484 = vmatprep.subr.mxu0 0.0
        %1485 = vmatpush1.msra.mxu0 0.0
        %1486 = vmatprep.subr.mxu0 0.0
        %1487 = vmatpush1.msra.mxu0 0.0
        %1488 = vmatprep.mubr.f32.mxu0 0.0
        %1489 = vmatmul.mubr.f32.gmra.mrb[0].mxu0 %v1403
        %v1490 = vpop.f32.mrb[0].mxu0
        %v1491 = vadd.f32 0.0, %v1490
        %v1492 = vpop.f32.mrb[0].mxu0
        %1493 = vmatprep.mubr.f32.mxu0 0.0
        %1494 = vmatmul.mubr.f32.gmra.mrb[0].mxu0 %v1404
        %v1495 = vpop.f32.mrb[0].mxu0
        %v1496 = vadd.f32 0.0, %v1495
        %v1497 = vpop.f32.mrb[0].mxu0
        %1498 = vmatprep.mubr.f32.mxu0 0.0
        %1499 = vmatmul.mubr.f32.gmra.mrb[0].mxu0 %v1405
        %v1500 = vpop.f32.mrb[0].mxu0
        %v1501 = vadd.f32 0.0, %v1500
        %v1502 = vpop.f32.mrb[0].mxu0
        %1503 = vmatprep.mubr.f32.mxu0 0.0
        %1504 = vmatmul.mubr.f32.gmra.mrb[0].mxu0 %v1406
        %v1505 = vpop.f32.mrb[0].mxu0
        %v1506 = vadd.f32 0.0, %v1505
        %v1507 = vpop.f32.mrb[0].mxu0
        %1508 = vdwg.mxu0
        %v1509 = vadd.f32 %v1399, %v1491
        %v1510 = vadd.f32 %v1400, %v1496
        %v1511 = vadd.f32 %v1401, %v1501
        %v1512 = vadd.f32 %v1402, %v1506
        %v1513 = vld [vmem:[#allocation2 + $0x10] sm:$0xff]
        %v1514 = vld [vmem:[#allocation2 + $0x18] sm:$0xff]
        %v1515 = vld [vmem:[#allocation2 + $0x20] sm:$0xff]
        %v1516 = vld [vmem:[#allocation2 + $0x28] sm:$0xff]
        %s1517 = scalar_lea.vmem %s3, 1024
        %v1518 = vld [vmem:[%s1517] sm:$0xff]
        %v1519 = vld [vmem:[%s1517 + $0x8] sm:$0xff]
        %v1520 = vld [vmem:[%s1517 + $0x10] sm:$0xff]
        %v1521 = vld [vmem:[%s1517 + $0x18] sm:$0xff]
        %v1522 = vld [vmem:[%s1517 + $0x20] sm:$0xff]
        %v1523 = vld [vmem:[%s1517 + $0x28] sm:$0xff]
        %v1524 = vld [vmem:[%s1517 + $0x30] sm:$0xff]
        %v1525 = vld [vmem:[%s1517 + $0x38] sm:$0xff]
        %v1526 = vld [vmem:[%s1517 + $0x40] sm:$0xff]
        %v1527 = vld [vmem:[%s1517 + $0x48] sm:$0xff]
        %v1528 = vld [vmem:[%s1517 + $0x50] sm:$0xff]
        %v1529 = vld [vmem:[%s1517 + $0x58] sm:$0xff]
        %v1530 = vld [vmem:[%s1517 + $0x60] sm:$0xff]
        %v1531 = vld [vmem:[%s1517 + $0x68] sm:$0xff]
        %v1532 = vld [vmem:[%s1517 + $0x70] sm:$0xff]
        %v1533 = vld [vmem:[%s1517 + $0x78] sm:$0xff]
        %1534 = vmatprep.subr.mxu0 0.0
        %1535 = vmatpush1.msra.mxu0 %v1518
        %1536 = vmatprep.subr.mxu0 0.0
        %1537 = vmatpush1.msra.mxu0 %v1519
        %1538 = vmatprep.subr.mxu0 0.0
        %1539 = vmatpush1.msra.mxu0 %v1520
        %1540 = vmatprep.subr.mxu0 0.0
        %1541 = vmatpush1.msra.mxu0 %v1521
        %1542 = vmatprep.subr.mxu0 0.0
        %1543 = vmatpush1.msra.mxu0 %v1522
        %1544 = vmatprep.subr.mxu0 0.0
        %1545 = vmatpush1.msra.mxu0 %v1523
        %1546 = vmatprep.subr.mxu0 0.0
        %1547 = vmatpush1.msra.mxu0 %v1524
        %1548 = vmatprep.subr.mxu0 0.0
        %1549 = vmatpush1.msra.mxu0 %v1525
        %1550 = vmatprep.subr.mxu0 0.0
        %1551 = vmatpush1.msra.mxu0 %v1526
        %1552 = vmatprep.subr.mxu0 0.0
        %1553 = vmatpush1.msra.mxu0 %v1527
        %1554 = vmatprep.subr.mxu0 0.0
        %1555 = vmatpush1.msra.mxu0 %v1528
        %1556 = vmatprep.subr.mxu0 0.0
        %1557 = vmatpush1.msra.mxu0 %v1529
        %1558 = vmatprep.subr.mxu0 0.0
        %1559 = vmatpush1.msra.mxu0 %v1530
        %1560 = vmatprep.subr.mxu0 0.0
        %1561 = vmatpush1.msra.mxu0 %v1531
        %1562 = vmatprep.subr.mxu0 0.0
        %1563 = vmatpush1.msra.mxu0 %v1532
        %1564 = vmatprep.subr.mxu0 0.0
        %1565 = vmatpush1.msra.mxu0 %v1533
        %1566 = vmatprep.subr.mxu0 0.0
        %1567 = vmatpush1.msra.mxu0 0.0
        %1568 = vmatprep.subr.mxu0 0.0
        %1569 = vmatpush1.msra.mxu0 0.0
        %1570 = vmatprep.subr.mxu0 0.0
        %1571 = vmatpush1.msra.mxu0 0.0
        %1572 = vmatprep.subr.mxu0 0.0
        %1573 = vmatpush1.msra.mxu0 0.0
        %1574 = vmatprep.subr.mxu0 0.0
        %1575 = vmatpush1.msra.mxu0 0.0
        %1576 = vmatprep.subr.mxu0 0.0
        %1577 = vmatpush1.msra.mxu0 0.0
        %1578 = vmatprep.subr.mxu0 0.0
        %1579 = vmatpush1.msra.mxu0 0.0
        %1580 = vmatprep.subr.mxu0 0.0
        %1581 = vmatpush1.msra.mxu0 0.0
        %1582 = vmatprep.subr.mxu0 0.0
        %1583 = vmatpush1.msra.mxu0 0.0
        %1584 = vmatprep.subr.mxu0 0.0
        %1585 = vmatpush1.msra.mxu0 0.0
        %1586 = vmatprep.subr.mxu0 0.0
        %1587 = vmatpush1.msra.mxu0 0.0
        %1588 = vmatprep.subr.mxu0 0.0
        %1589 = vmatpush1.msra.mxu0 0.0
        %1590 = vmatprep.subr.mxu0 0.0
        %1591 = vmatpush1.msra.mxu0 0.0
        %1592 = vmatprep.subr.mxu0 0.0
        %1593 = vmatpush1.msra.mxu0 0.0
        %1594 = vmatprep.subr.mxu0 0.0
        %1595 = vmatpush1.msra.mxu0 0.0
        %1596 = vmatprep.subr.mxu0 0.0
        %1597 = vmatpush1.msra.mxu0 0.0
        %1598 = vmatprep.mubr.f32.mxu0 0.0
        %1599 = vmatmul.mubr.f32.gmra.mrb[0].mxu0 %v1513
        %v1600 = vpop.f32.mrb[0].mxu0
        %v1601 = vadd.f32 0.0, %v1600
        %v1602 = vpop.f32.mrb[0].mxu0
        %1603 = vmatprep.mubr.f32.mxu0 0.0
        %1604 = vmatmul.mubr.f32.gmra.mrb[0].mxu0 %v1514
        %v1605 = vpop.f32.mrb[0].mxu0
        %v1606 = vadd.f32 0.0, %v1605
        %v1607 = vpop.f32.mrb[0].mxu0
        %1608 = vmatprep.mubr.f32.mxu0 0.0
        %1609 = vmatmul.mubr.f32.gmra.mrb[0].mxu0 %v1515
        %v1610 = vpop.f32.mrb[0].mxu0
        %v1611 = vadd.f32 0.0, %v1610
        %v1612 = vpop.f32.mrb[0].mxu0
        %1613 = vmatprep.mubr.f32.mxu0 0.0
        %1614 = vmatmul.mubr.f32.gmra.mrb[0].mxu0 %v1516
        %v1615 = vpop.f32.mrb[0].mxu0
        %v1616 = vadd.f32 0.0, %v1615
        %v1617 = vpop.f32.mrb[0].mxu0
        %1618 = vdwg.mxu0
        %v1619 = vadd.f32 %v1509, %v1601
        %v1620 = vadd.f32 %v1510, %v1606
        %v1621 = vadd.f32 %v1511, %v1611
        %v1622 = vadd.f32 %v1512, %v1616
        %v1623 = vld [vmem:[%s4] sm:$0x1]
        %v1625 = vlaneseq
        %v1626 = vshrl.u32 %v1625, 7
        %v1627 = vsub.s32 0, %v1626
        %v1628 = vrot.slane %v1623, %v1627
        %v1630 = vadd.f32 %v1619, %v1628
        %v1631 = vadd.f32 %v1620, %v1628
        %v1632 = vadd.f32 %v1621, %v1628
        %v1633 = vadd.f32 %v1622, %v1628
        %v1634 = vmax.f32 %v1630, 0.0
        %v1635 = vmax.f32 %v1631, 0.0
        %v1636 = vmax.f32 %v1632, 0.0
        %v1637 = vmax.f32 %v1633, 0.0
        %1638 = vst [vmem:[#allocation3] sm:$0xff] %v1634
        %1639 = vst [vmem:[#allocation3 + $0x8] sm:$0xff] %v1635
        %1640 = vst [vmem:[#allocation3 + $0x10] sm:$0xff] %v1636
        %1641 = vst [vmem:[#allocation3 + $0x18] sm:$0xff] %v1637
        %v1642 = vld [vmem:[#allocation3] sm:$0xff]
        %v1643 = vld [vmem:[#allocation3 + $0x8] sm:$0xff]
        %v1644 = vld [vmem:[#allocation3 + $0x10] sm:$0x1]
        %v1645 = vld [vmem:[#allocation3 + $0x1] sm:$0xff]
        %v1646 = vld [vmem:[#allocation3 + $0x9] sm:$0xff]
        %v1647 = vld [vmem:[#allocation3 + $0x11] sm:$0x1]
        %v1648 = vmax.f32 %v1642, %v1645
        %v1649 = vmax.f32 %v1643, %v1646
        %v1650 = vmax.f32 %v1644, %v1647
        %v1651 = vld [vmem:[#allocation3 + $0x7] sm:$0xff]
        %v1652 = vld [vmem:[#allocation3 + $0xf] sm:$0xff]
        %v1653 = vld [vmem:[#allocation3 + $0x17] sm:$0x1]
        %v1654 = vld [vmem:[#allocation3 + $0x10] sm:$0xff]
        %v1655 = vld [vmem:[#allocation3 + $0x18] sm:$0x1]
        %v1656 = vmax.f32 %v1651, %v1643
        %v1657 = vmax.f32 %v1652, %v1654
        %v1658 = vmax.f32 %v1653, %v1655
        %v1659 = vmax.f32 %v1648, %v1656
        %v1660 = vmax.f32 %v1649, %v1657
        %v1661 = vmax.f32 %v1650, %v1658
        %v1662 = vld [vmem:[%s5] sm:$0xff]
        %v1663 = vld [vmem:[%s5 + $0x8] sm:$0xff]
        %v1664 = vld [vmem:[%s5 + $0x10] sm:$0xff]
        %v1665 = vld [vmem:[%s5 + $0x18] sm:$0xff]
        %v1666 = vld [vmem:[%s5 + $0x20] sm:$0xff]
        %v1667 = vld [vmem:[%s5 + $0x28] sm:$0xff]
        %v1668 = vld [vmem:[%s5 + $0x30] sm:$0xff]
        %v1669 = vld [vmem:[%s5 + $0x38] sm:$0xff]
        %v1670 = vld [vmem:[%s5 + $0x40] sm:$0xff]
        %v1671 = vld [vmem:[%s5 + $0x48] sm:$0xff]
        %v1672 = vld [vmem:[%s5 + $0x50] sm:$0xff]
        %v1673 = vld [vmem:[%s5 + $0x58] sm:$0xff]
        %v1674 = vld [vmem:[%s5 + $0x60] sm:$0xff]
        %v1675 = vld [vmem:[%s5 + $0x68] sm:$0xff]
        %v1676 = vld [vmem:[%s5 + $0x70] sm:$0xff]
        %v1677 = vld [vmem:[%s5 + $0x78] sm:$0xff]
        %s1678 = scalar_lea.vmem %s5, 128
        %v1679 = vld [vmem:[%s1678] sm:$0xff]
        %v1680 = vld [vmem:[%s1678 + $0x8] sm:$0xff]
        %v1681 = vld [vmem:[%s1678 + $0x10] sm:$0xff]
        %v1682 = vld [vmem:[%s1678 + $0x18] sm:$0xff]
        %v1683 = vld [vmem:[%s1678 + $0x20] sm:$0xff]
        %v1684 = vld [vmem:[%s1678 + $0x28] sm:$0xff]
        %v1685 = vld [vmem:[%s1678 + $0x30] sm:$0xff]
        %v1686 = vld [vmem:[%s1678 + $0x38] sm:$0xff]
        %v1687 = vld [vmem:[%s1678 + $0x40] sm:$0xff]
        %v1688 = vld [vmem:[%s1678 + $0x48] sm:$0xff]
        %v1689 = vld [vmem:[%s1678 + $0x50] sm:$0xff]
        %v1690 = vld [vmem:[%s1678 + $0x58] sm:$0xff]
        %v1691 = vld [vmem:[%s1678 + $0x60] sm:$0xff]
        %v1692 = vld [vmem:[%s1678 + $0x68] sm:$0xff]
        %v1693 = vld [vmem:[%s1678 + $0x70] sm:$0xff]
        %v1694 = vld [vmem:[%s1678 + $0x78] sm:$0xff]
        %v1696 = vrot.slane %v1659, 2
        %1698 = vmatprep.subr.mxu0 0.0
        %1699 = vmatpush1.msra.mxu0 %v1679
        %1700 = vmatprep.subr.mxu0 0.0
        %1701 = vmatpush1.msra.mxu0 %v1680
        %1702 = vmatprep.subr.mxu0 0.0
        %1703 = vmatpush1.msra.mxu0 %v1681
        %1704 = vmatprep.subr.mxu0 0.0
        %1705 = vmatpush1.msra.mxu0 %v1682
        %1706 = vmatprep.subr.mxu0 0.0
        %1707 = vmatpush1.msra.mxu0 %v1683
        %1708 = vmatprep.subr.mxu0 0.0
        %1709 = vmatpush1.msra.mxu0 %v1684
        %1710 = vmatprep.subr.mxu0 0.0
        %1711 = vmatpush1.msra.mxu0 %v1685
        %1712 = vmatprep.subr.mxu0 0.0
        %1713 = vmatpush1.msra.mxu0 %v1686
        %1714 = vmatprep.subr.mxu0 0.0
        %1715 = vmatpush1.msra.mxu0 %v1687
        %1716 = vmatprep.subr.mxu0 0.0
        %1717 = vmatpush1.msra.mxu0 %v1688
        %1718 = vmatprep.subr.mxu0 0.0
        %1719 = vmatpush1.msra.mxu0 %v1689
        %1720 = vmatprep.subr.mxu0 0.0
        %1721 = vmatpush1.msra.mxu0 %v1690
        %1722 = vmatprep.subr.mxu0 0.0
        %1723 = vmatpush1.msra.mxu0 %v1691
        %1724 = vmatprep.subr.mxu0 0.0
        %1725 = vmatpush1.msra.mxu0 %v1692
        %1726 = vmatprep.subr.mxu0 0.0
        %1727 = vmatpush1.msra.mxu0 %v1693
        %1728 = vmatprep.subr.mxu0 0.0
        %1729 = vmatpush1.msra.mxu0 %v1694
        %1730 = vmatprep.subr.mxu0 0.0
        %1731 = vmatpush1.msra.mxu0 0.0
        %1732 = vmatprep.subr.mxu0 0.0
        %1733 = vmatpush1.msra.mxu0 0.0
        %1734 = vmatprep.subr.mxu0 0.0
        %1735 = vmatpush1.msra.mxu0 0.0
        %1736 = vmatprep.subr.mxu0 0.0
        %1737 = vmatpush1.msra.mxu0 0.0
        %1738 = vmatprep.subr.mxu0 0.0
        %1739 = vmatpush1.msra.mxu0 0.0
        %1740 = vmatprep.subr.mxu0 0.0
        %1741 = vmatpush1.msra.mxu0 0.0
        %1742 = vmatprep.subr.mxu0 0.0
        %1743 = vmatpush1.msra.mxu0 0.0
        %1744 = vmatprep.subr.mxu0 0.0
        %1745 = vmatpush1.msra.mxu0 0.0
        %1746 = vmatprep.subr.mxu0 0.0
        %1747 = vmatpush1.msra.mxu0 0.0
        %1748 = vmatprep.subr.mxu0 0.0
        %1749 = vmatpush1.msra.mxu0 0.0
        %1750 = vmatprep.subr.mxu0 0.0
        %1751 = vmatpush1.msra.mxu0 0.0
        %1752 = vmatprep.subr.mxu0 0.0
        %1753 = vmatpush1.msra.mxu0 0.0
        %1754 = vmatprep.subr.mxu0 0.0
        %1755 = vmatpush1.msra.mxu0 0.0
        %1756 = vmatprep.subr.mxu0 0.0
        %1757 = vmatpush1.msra.mxu0 0.0
        %1758 = vmatprep.subr.mxu0 0.0
        %1759 = vmatpush1.msra.mxu0 0.0
        %1760 = vmatprep.subr.mxu0 0.0
        %1761 = vmatpush1.msra.mxu0 0.0
        %1762 = vmatprep.mubr.f32.mxu0 0.0
        %1763 = vmatmul.mubr.f32.gmra.mrb[0].mxu0 %v1696
        %v1764 = vpop.f32.mrb[0].mxu0
        %v1765 = vadd.f32 0.0, %v1764
        %v1766 = vpop.f32.mrb[0].mxu0
        %1767 = vdwg.mxu0
        %1768 = vmatprep.subr.mxu0 0.0
        %1769 = vmatpush1.msra.mxu0 %v1662
        %1770 = vmatprep.subr.mxu0 0.0
        %1771 = vmatpush1.msra.mxu0 %v1663
        %1772 = vmatprep.subr.mxu0 0.0
        %1773 = vmatpush1.msra.mxu0 %v1664
        %1774 = vmatprep.subr.mxu0 0.0
        %1775 = vmatpush1.msra.mxu0 %v1665
        %1776 = vmatprep.subr.mxu0 0.0
        %1777 = vmatpush1.msra.mxu0 %v1666
        %1778 = vmatprep.subr.mxu0 0.0
        %1779 = vmatpush1.msra.mxu0 %v1667
        %1780 = vmatprep.subr.mxu0 0.0
        %1781 = vmatpush1.msra.mxu0 %v1668
        %1782 = vmatprep.subr.mxu0 0.0
        %1783 = vmatpush1.msra.mxu0 %v1669
        %1784 = vmatprep.subr.mxu0 0.0
        %1785 = vmatpush1.msra.mxu0 %v1670
        %1786 = vmatprep.subr.mxu0 0.0
        %1787 = vmatpush1.msra.mxu0 %v1671
        %1788 = vmatprep.subr.mxu0 0.0
        %1789 = vmatpush1.msra.mxu0 %v1672
        %1790 = vmatprep.subr.mxu0 0.0
        %1791 = vmatpush1.msra.mxu0 %v1673
        %1792 = vmatprep.subr.mxu0 0.0
        %1793 = vmatpush1.msra.mxu0 %v1674
        %1794 = vmatprep.subr.mxu0 0.0
        %1795 = vmatpush1.msra.mxu0 %v1675
        %1796 = vmatprep.subr.mxu0 0.0
        %1797 = vmatpush1.msra.mxu0 %v1676
        %1798 = vmatprep.subr.mxu0 0.0
        %1799 = vmatpush1.msra.mxu0 %v1677
        %1800 = vmatprep.subr.mxu0 0.0
        %1801 = vmatpush1.msra.mxu0 0.0
        %1802 = vmatprep.subr.mxu0 0.0
        %1803 = vmatpush1.msra.mxu0 0.0
        %1804 = vmatprep.subr.mxu0 0.0
        %1805 = vmatpush1.msra.mxu0 0.0
        %1806 = vmatprep.subr.mxu0 0.0
        %1807 = vmatpush1.msra.mxu0 0.0
        %1808 = vmatprep.subr.mxu0 0.0
        %1809 = vmatpush1.msra.mxu0 0.0
        %1810 = vmatprep.subr.mxu0 0.0
        %1811 = vmatpush1.msra.mxu0 0.0
        %1812 = vmatprep.subr.mxu0 0.0
        %1813 = vmatpush1.msra.mxu0 0.0
        %1814 = vmatprep.subr.mxu0 0.0
        %1815 = vmatpush1.msra.mxu0 0.0
        %1816 = vmatprep.subr.mxu0 0.0
        %1817 = vmatpush1.msra.mxu0 0.0
        %1818 = vmatprep.subr.mxu0 0.0
        %1819 = vmatpush1.msra.mxu0 0.0
        %1820 = vmatprep.subr.mxu0 0.0
        %1821 = vmatpush1.msra.mxu0 0.0
        %1822 = vmatprep.subr.mxu0 0.0
        %1823 = vmatpush1.msra.mxu0 0.0
        %1824 = vmatprep.subr.mxu0 0.0
        %1825 = vmatpush1.msra.mxu0 0.0
        %1826 = vmatprep.subr.mxu0 0.0
        %1827 = vmatpush1.msra.mxu0 0.0
        %1828 = vmatprep.subr.mxu0 0.0
        %1829 = vmatpush1.msra.mxu0 0.0
        %1830 = vmatprep.subr.mxu0 0.0
        %1831 = vmatpush1.msra.mxu0 0.0
        %1832 = vmatprep.mubr.f32.mxu0 0.0
        %1833 = vmatmul.mubr.f32.gmra.mrb[0].mxu0 %v1659
        %v1834 = vpop.f32.mrb[0].mxu0
        %v1835 = vadd.f32 %v1765, %v1834
        %v1836 = vpop.f32.mrb[0].mxu0
        %1837 = vdwg.mxu0
        %s1838 = scalar_lea.vmem %s5, 256
        %v1839 = vld [vmem:[%s1838] sm:$0xff]
        %v1840 = vld [vmem:[%s1838 + $0x8] sm:$0xff]
        %v1841 = vld [vmem:[%s1838 + $0x10] sm:$0xff]
        %v1842 = vld [vmem:[%s1838 + $0x18] sm:$0xff]
        %v1843 = vld [vmem:[%s1838 + $0x20] sm:$0xff]
        %v1844 = vld [vmem:[%s1838 + $0x28] sm:$0xff]
        %v1845 = vld [vmem:[%s1838 + $0x30] sm:$0xff]
        %v1846 = vld [vmem:[%s1838 + $0x38] sm:$0xff]
        %v1847 = vld [vmem:[%s1838 + $0x40] sm:$0xff]
        %v1848 = vld [vmem:[%s1838 + $0x48] sm:$0xff]
        %v1849 = vld [vmem:[%s1838 + $0x50] sm:$0xff]
        %v1850 = vld [vmem:[%s1838 + $0x58] sm:$0xff]
        %v1851 = vld [vmem:[%s1838 + $0x60] sm:$0xff]
        %v1852 = vld [vmem:[%s1838 + $0x68] sm:$0xff]
        %v1853 = vld [vmem:[%s1838 + $0x70] sm:$0xff]
        %v1854 = vld [vmem:[%s1838 + $0x78] sm:$0xff]
        %v1856 = vrot.slane %v1660, 6
        %1858 = vmatprep.subr.mxu0 0.0
        %1859 = vmatpush1.msra.mxu0 %v1839
        %1860 = vmatprep.subr.mxu0 0.0
        %1861 = vmatpush1.msra.mxu0 %v1840
        %1862 = vmatprep.subr.mxu0 0.0
        %1863 = vmatpush1.msra.mxu0 %v1841
        %1864 = vmatprep.subr.mxu0 0.0
        %1865 = vmatpush1.msra.mxu0 %v1842
        %1866 = vmatprep.subr.mxu0 0.0
        %1867 = vmatpush1.msra.mxu0 %v1843
        %1868 = vmatprep.subr.mxu0 0.0
        %1869 = vmatpush1.msra.mxu0 %v1844
        %1870 = vmatprep.subr.mxu0 0.0
        %1871 = vmatpush1.msra.mxu0 %v1845
        %1872 = vmatprep.subr.mxu0 0.0
        %1873 = vmatpush1.msra.mxu0 %v1846
        %1874 = vmatprep.subr.mxu0 0.0
        %1875 = vmatpush1.msra.mxu0 %v1847
        %1876 = vmatprep.subr.mxu0 0.0
        %1877 = vmatpush1.msra.mxu0 %v1848
        %1878 = vmatprep.subr.mxu0 0.0
        %1879 = vmatpush1.msra.mxu0 %v1849
        %1880 = vmatprep.subr.mxu0 0.0
        %1881 = vmatpush1.msra.mxu0 %v1850
        %1882 = vmatprep.subr.mxu0 0.0
        %1883 = vmatpush1.msra.mxu0 %v1851
        %1884 = vmatprep.subr.mxu0 0.0
        %1885 = vmatpush1.msra.mxu0 %v1852
        %1886 = vmatprep.subr.mxu0 0.0
        %1887 = vmatpush1.msra.mxu0 %v1853
        %1888 = vmatprep.subr.mxu0 0.0
        %1889 = vmatpush1.msra.mxu0 %v1854
        %1890 = vmatprep.subr.mxu0 0.0
        %1891 = vmatpush1.msra.mxu0 0.0
        %1892 = vmatprep.subr.mxu0 0.0
        %1893 = vmatpush1.msra.mxu0 0.0
        %1894 = vmatprep.subr.mxu0 0.0
        %1895 = vmatpush1.msra.mxu0 0.0
        %1896 = vmatprep.subr.mxu0 0.0
        %1897 = vmatpush1.msra.mxu0 0.0
        %1898 = vmatprep.subr.mxu0 0.0
        %1899 = vmatpush1.msra.mxu0 0.0
        %1900 = vmatprep.subr.mxu0 0.0
        %1901 = vmatpush1.msra.mxu0 0.0
        %1902 = vmatprep.subr.mxu0 0.0
        %1903 = vmatpush1.msra.mxu0 0.0
        %1904 = vmatprep.subr.mxu0 0.0
        %1905 = vmatpush1.msra.mxu0 0.0
        %1906 = vmatprep.subr.mxu0 0.0
        %1907 = vmatpush1.msra.mxu0 0.0
        %1908 = vmatprep.subr.mxu0 0.0
        %1909 = vmatpush1.msra.mxu0 0.0
        %1910 = vmatprep.subr.mxu0 0.0
        %1911 = vmatpush1.msra.mxu0 0.0
        %1912 = vmatprep.subr.mxu0 0.0
        %1913 = vmatpush1.msra.mxu0 0.0
        %1914 = vmatprep.subr.mxu0 0.0
        %1915 = vmatpush1.msra.mxu0 0.0
        %1916 = vmatprep.subr.mxu0 0.0
        %1917 = vmatpush1.msra.mxu0 0.0
        %1918 = vmatprep.subr.mxu0 0.0
        %1919 = vmatpush1.msra.mxu0 0.0
        %1920 = vmatprep.subr.mxu0 0.0
        %1921 = vmatpush1.msra.mxu0 0.0
        %1922 = vmatprep.mubr.f32.mxu0 0.0
        %1923 = vmatmul.mubr.f32.gmra.mrb[0].mxu0 %v1856
        %v1924 = vpop.f32.mrb[0].mxu0
        %v1925 = vadd.f32 0.0, %v1924
        %v1926 = vpop.f32.mrb[0].mxu0
        %1927 = vdwg.mxu0
        %v1928 = vadd.f32 %v1835, %v1925
        %s1929 = scalar_lea.vmem %s5, 384
        %v1930 = vld [vmem:[%s1929] sm:$0xff]
        %v1931 = vld [vmem:[%s1929 + $0x8] sm:$0xff]
        %v1932 = vld [vmem:[%s1929 + $0x10] sm:$0xff]
        %v1933 = vld [vmem:[%s1929 + $0x18] sm:$0xff]
        %v1934 = vld [vmem:[%s1929 + $0x20] sm:$0xff]
        %v1935 = vld [vmem:[%s1929 + $0x28] sm:$0xff]
        %v1936 = vld [vmem:[%s1929 + $0x30] sm:$0xff]
        %v1937 = vld [vmem:[%s1929 + $0x38] sm:$0xff]
        %v1938 = vld [vmem:[%s1929 + $0x40] sm:$0xff]
        %v1939 = vld [vmem:[%s1929 + $0x48] sm:$0xff]
        %v1940 = vld [vmem:[%s1929 + $0x50] sm:$0xff]
        %v1941 = vld [vmem:[%s1929 + $0x58] sm:$0xff]
        %v1942 = vld [vmem:[%s1929 + $0x60] sm:$0xff]
        %v1943 = vld [vmem:[%s1929 + $0x68] sm:$0xff]
        %v1944 = vld [vmem:[%s1929 + $0x70] sm:$0xff]
        %v1945 = vld [vmem:[%s1929 + $0x78] sm:$0xff]
        %1946 = vmatprep.subr.mxu0 0.0
        %1947 = vmatpush1.msra.mxu0 %v1930
        %1948 = vmatprep.subr.mxu0 0.0
        %1949 = vmatpush1.msra.mxu0 %v1931
        %1950 = vmatprep.subr.mxu0 0.0
        %1951 = vmatpush1.msra.mxu0 %v1932
        %1952 = vmatprep.subr.mxu0 0.0
        %1953 = vmatpush1.msra.mxu0 %v1933
        %1954 = vmatprep.subr.mxu0 0.0
        %1955 = vmatpush1.msra.mxu0 %v1934
        %1956 = vmatprep.subr.mxu0 0.0
        %1957 = vmatpush1.msra.mxu0 %v1935
        %1958 = vmatprep.subr.mxu0 0.0
        %1959 = vmatpush1.msra.mxu0 %v1936
        %1960 = vmatprep.subr.mxu0 0.0
        %1961 = vmatpush1.msra.mxu0 %v1937
        %1962 = vmatprep.subr.mxu0 0.0
        %1963 = vmatpush1.msra.mxu0 %v1938
        %1964 = vmatprep.subr.mxu0 0.0
        %1965 = vmatpush1.msra.mxu0 %v1939
        %1966 = vmatprep.subr.mxu0 0.0
        %1967 = vmatpush1.msra.mxu0 %v1940
        %1968 = vmatprep.subr.mxu0 0.0
        %1969 = vmatpush1.msra.mxu0 %v1941
        %1970 = vmatprep.subr.mxu0 0.0
        %1971 = vmatpush1.msra.mxu0 %v1942
        %1972 = vmatprep.subr.mxu0 0.0
        %1973 = vmatpush1.msra.mxu0 %v1943
        %1974 = vmatprep.subr.mxu0 0.0
        %1975 = vmatpush1.msra.mxu0 %v1944
        %1976 = vmatprep.subr.mxu0 0.0
        %1977 = vmatpush1.msra.mxu0 %v1945
        %1978 = vmatprep.subr.mxu0 0.0
        %1979 = vmatpush1.msra.mxu0 0.0
        %1980 = vmatprep.subr.mxu0 0.0
        %1981 = vmatpush1.msra.mxu0 0.0
        %1982 = vmatprep.subr.mxu0 0.0
        %1983 = vmatpush1.msra.mxu0 0.0
        %1984 = vmatprep.subr.mxu0 0.0
        %1985 = vmatpush1.msra.mxu0 0.0
        %1986 = vmatprep.subr.mxu0 0.0
        %1987 = vmatpush1.msra.mxu0 0.0
        %1988 = vmatprep.subr.mxu0 0.0
        %1989 = vmatpush1.msra.mxu0 0.0
        %1990 = vmatprep.subr.mxu0 0.0
        %1991 = vmatpush1.msra.mxu0 0.0
        %1992 = vmatprep.subr.mxu0 0.0
        %1993 = vmatpush1.msra.mxu0 0.0
        %1994 = vmatprep.subr.mxu0 0.0
        %1995 = vmatpush1.msra.mxu0 0.0
        %1996 = vmatprep.subr.mxu0 0.0
        %1997 = vmatpush1.msra.mxu0 0.0
        %1998 = vmatprep.subr.mxu0 0.0
        %1999 = vmatpush1.msra.mxu0 0.0
        %2000 = vmatprep.subr.mxu0 0.0
        %2001 = vmatpush1.msra.mxu0 0.0
        %2002 = vmatprep.subr.mxu0 0.0
        %2003 = vmatpush1.msra.mxu0 0.0
        %2004 = vmatprep.subr.mxu0 0.0
        %2005 = vmatpush1.msra.mxu0 0.0
        %2006 = vmatprep.subr.mxu0 0.0
        %2007 = vmatpush1.msra.mxu0 0.0
        %2008 = vmatprep.subr.mxu0 0.0
        %2009 = vmatpush1.msra.mxu0 0.0
        %2010 = vmatprep.mubr.f32.mxu0 0.0
        %2011 = vmatmul.mubr.f32.gmra.mrb[0].mxu0 %v1661
        %v2012 = vpop.f32.mrb[0].mxu0
        %v2013 = vadd.f32 0.0, %v2012
        %v2014 = vpop.f32.mrb[0].mxu0
        %2015 = vdwg.mxu0
        %v2016 = vadd.f32 %v1928, %v2013
        %v2017 = vld [vmem:[%s6] sm:$0x1]
        %v2018 = vadd.f32 %v2016, %v2017
        %v2019 = vmax.f32 %v2018, 0.0
        %v2020 = vld [vmem:[%s7] sm:$0xff]
        %v2021 = vld [vmem:[%s7 + $0x8] sm:$0xff]
        %v2022 = vld [vmem:[%s7 + $0x10] sm:$0xff]
        %v2023 = vld [vmem:[%s7 + $0x18] sm:$0xff]
        %v2024 = vld [vmem:[%s7 + $0x20] sm:$0xff]
        %v2025 = vld [vmem:[%s7 + $0x28] sm:$0xff]
        %v2026 = vld [vmem:[%s7 + $0x30] sm:$0xff]
        %v2027 = vld [vmem:[%s7 + $0x38] sm:$0xff]
        %v2028 = vld [vmem:[%s7 + $0x40] sm:$0xff]
        %v2029 = vld [vmem:[%s7 + $0x48] sm:$0xff]
        %v2030 = vld [vmem:[%s7 + $0x50] sm:$0xff]
        %v2031 = vld [vmem:[%s7 + $0x58] sm:$0xff]
        %v2032 = vld [vmem:[%s7 + $0x60] sm:$0xff]
        %v2033 = vld [vmem:[%s7 + $0x68] sm:$0xff]
        %v2034 = vld [vmem:[%s7 + $0x70] sm:$0xff]
        %v2035 = vld [vmem:[%s7 + $0x78] sm:$0xff]
        %v2036 = vld [vmem:[%s8] sm:$0x1]
        %2037 = vmatprep.subr.mxu0 0.0
        %2038 = vmatpush1.msra.mxu0 %v2020
        %2039 = vmatprep.subr.mxu0 0.0
        %2040 = vmatpush1.msra.mxu0 %v2021
        %2041 = vmatprep.subr.mxu0 0.0
        %2042 = vmatpush1.msra.mxu0 %v2022
        %2043 = vmatprep.subr.mxu0 0.0
        %2044 = vmatpush1.msra.mxu0 %v2023
        %2045 = vmatprep.subr.mxu0 0.0
        %2046 = vmatpush1.msra.mxu0 %v2024
        %2047 = vmatprep.subr.mxu0 0.0
        %2048 = vmatpush1.msra.mxu0 %v2025
        %2049 = vmatprep.subr.mxu0 0.0
        %2050 = vmatpush1.msra.mxu0 %v2026
        %2051 = vmatprep.subr.mxu0 0.0
        %2052 = vmatpush1.msra.mxu0 %v2027
        %2053 = vmatprep.subr.mxu0 0.0
        %2054 = vmatpush1.msra.mxu0 %v2028
        %2055 = vmatprep.subr.mxu0 0.0
        %2056 = vmatpush1.msra.mxu0 %v2029
        %2057 = vmatprep.subr.mxu0 0.0
        %2058 = vmatpush1.msra.mxu0 %v2030
        %2059 = vmatprep.subr.mxu0 0.0
        %2060 = vmatpush1.msra.mxu0 %v2031
        %2061 = vmatprep.subr.mxu0 0.0
        %2062 = vmatpush1.msra.mxu0 %v2032
        %2063 = vmatprep.subr.mxu0 0.0
        %2064 = vmatpush1.msra.mxu0 %v2033
        %2065 = vmatprep.subr.mxu0 0.0
        %2066 = vmatpush1.msra.mxu0 %v2034
        %2067 = vmatprep.subr.mxu0 0.0
        %2068 = vmatpush1.msra.mxu0 %v2035
        %2069 = vmatprep.subr.mxu0 0.0
        %2070 = vmatpush1.msra.mxu0 0.0
        %2071 = vmatprep.subr.mxu0 0.0
        %2072 = vmatpush1.msra.mxu0 0.0
        %2073 = vmatprep.subr.mxu0 0.0
        %2074 = vmatpush1.msra.mxu0 0.0
        %2075 = vmatprep.subr.mxu0 0.0
        %2076 = vmatpush1.msra.mxu0 0.0
        %2077 = vmatprep.subr.mxu0 0.0
        %2078 = vmatpush1.msra.mxu0 0.0
        %2079 = vmatprep.subr.mxu0 0.0
        %2080 = vmatpush1.msra.mxu0 0.0
        %2081 = vmatprep.subr.mxu0 0.0
        %2082 = vmatpush1.msra.mxu0 0.0
        %2083 = vmatprep.subr.mxu0 0.0
        %2084 = vmatpush1.msra.mxu0 0.0
        %2085 = vmatprep.subr.mxu0 0.0
        %2086 = vmatpush1.msra.mxu0 0.0
        %2087 = vmatprep.subr.mxu0 0.0
        %2088 = vmatpush1.msra.mxu0 0.0
        %2089 = vmatprep.subr.mxu0 0.0
        %2090 = vmatpush1.msra.mxu0 0.0
        %2091 = vmatprep.subr.mxu0 0.0
        %2092 = vmatpush1.msra.mxu0 0.0
        %2093 = vmatprep.subr.mxu0 0.0
        %2094 = vmatpush1.msra.mxu0 0.0
        %2095 = vmatprep.subr.mxu0 0.0
        %2096 = vmatpush1.msra.mxu0 0.0
        %2097 = vmatprep.subr.mxu0 0.0
        %2098 = vmatpush1.msra.mxu0 0.0
        %2099 = vmatprep.subr.mxu0 0.0
        %2100 = vmatpush1.msra.mxu0 0.0
        %2101 = vmatprep.mubr.f32.mxu0 0.0
        %2102 = vmatmul.mubr.f32.gmra.mrb[0].mxu0 %v2019
        %v2103 = vpop.f32.mrb[0].mxu0
        %v2104 = vadd.f32 %v2036, %v2103
        %v2105 = vpop.f32.mrb[0].mxu0
        %2106 = vdwg.mxu0
        %2107 = vst [vmem:[%s324] sm:$0x1] %v2104
        %s2108 = sand.u32 %s225, 1
        %s2109 = scalar_lea.sflag [#allocation5], %s2108
        %s2110 = sand.u32 %s225, 1
        %s2111 = scalar_lea.vmem [#allocation4], %s2110
        // Predicated region
        $region57: #{cnn_forward.1} parent=55 // pred_check
          %p2112 = pneg %p235
        $region58: #{cnn_forward.1} parent=55 // pred_check_branch
          %2114 = sbr.rel (%p2112) target = $region60
        $region59: #{cnn_forward.1} parent=55 // pred_region
          %s2116 = ssub.s32 16, 16
          %2117 = vsyncadd %s2109, %s2116
          %s2118 = smul.addr %s23, 16
          %s2119 = scalar_lea.hbm %s9, %s2118
          %s2121 = sshll.u32 %s2111, 4
          %s2122 = int_to_ptr.vmem [resolvable:$true] %s2121
          %2124 = dma.vmem_to_hbm [thread:$0]  %s2122, 16, %s2119, %s2109
        $region60: #{cnn_forward.1} parent=55 // pred_fallthru
          _
      $region56: #{cnn_forward.1} parent=5 // pred_fallthru
        _
      %p2125 = scmp.le.s32.totalorder 2, %s18
      // Predicated region
      $region61: #{cnn_forward.1} parent=5 // pred_check
        %p2126 = pneg %p2125
      $region62: #{cnn_forward.1} parent=5 // pred_check_branch
        %2128 = sbr.rel (%p2126) target = $region64
      $region63: #{cnn_forward.1} parent=5 // pred_region
        %s2129 = ssub.s32 %s18, 2
        // Predicated region
        $region65: #{cnn_forward.1} parent=63 // pred_check
          %p2130 = pneg %p241
        $region66: #{cnn_forward.1} parent=63 // pred_check_branch
          %2132 = sbr.rel (%p2130) target = $region68
        $region67: #{cnn_forward.1} parent=63 // pred_region
          %s2133 = sand.u32 %s226, 1
          %s2134 = scalar_lea.sflag [#allocation5], %s2133
          %s2135 = sand.u32 %s226, 1
          %s2136 = scalar_lea.vmem [#allocation4], %s2135
          %2137 = dma.done %s2134, 16
        $region68: #{cnn_forward.1} parent=63 // pred_fallthru
          _
      $region64: #{cnn_forward.1} parent=5 // pred_fallthru
        _
    $region6: #{cnn_forward.1} parent=1 // loop_footer
      %s22 = sadd.s32 1, %s18
    $region7: #{cnn_forward.1} parent=1 // loop_footer_branch
      %17 = sbr.rel target = $region3
    $region8: #{cnn_forward.1} parent=1 // loop_exit
      _
    %2138 = vsyncpa [#allocation5], 1
    %s2139 = scalar_lea.sflag [#allocation5], 1
    %2140 = vsyncpa %s2139, 1

</llo_original>
